<compile_context>
chip_gen: v7x
topology: tpu7x:2x2x1
jax: 0.10.0
libtpu: 0.0.40
codegen_flags: <defaults>
</compile_context>

<pallas_src>
import functools

import jax
import jax.numpy as jnp
from jax.experimental import pallas as pl
from jax.experimental.pallas import tpu as pltpu


def _round_up(x, m):
    return (x + m - 1) // m * m


# ----------------------------- Pallas kernels -------------------------------

def _mm_bias_kernel(x_ref, w_ref, b_ref, o_ref, *, apply_relu):
    """out = x @ w_scaled + bias [+ ReLU]   (1x1 conv with BN folded into w)."""
    acc = jnp.dot(x_ref[...].astype(jnp.bfloat16), w_ref[...],
                  preferred_element_type=jnp.float32)
    out = acc + b_ref[...]
    if apply_relu:
        out = jnp.maximum(out, 0.0)
    o_ref[...] = out.astype(o_ref.dtype)


def _mm_bias_dual_kernel(x_ref, w_ref, x2_ref, w2_ref, b_ref, o_ref, *,
                         apply_relu):
    """out = x @ w_scaled + x2 @ w2_scaled + bias [+ ReLU]
    (conv3+BN3 fused with the 1x1 shortcut conv + BN_sc and the final ReLU)."""
    acc = jnp.dot(x_ref[...].astype(jnp.bfloat16), w_ref[...],
                  preferred_element_type=jnp.float32)
    acc = acc + jnp.dot(x2_ref[...].astype(jnp.bfloat16), w2_ref[...],
                        preferred_element_type=jnp.float32)
    out = acc + b_ref[...]
    if apply_relu:
        out = jnp.maximum(out, 0.0)
    o_ref[...] = out.astype(o_ref.dtype)


def _conv3x3_kernel(x_ref, w_ref, b_ref, o_ref, acc_ref, *, offs, wo):
    """One ky-tap of a 3x3 conv.  The 3 kx-taps are contiguous static slices
    of the loaded row band; accumulation over ky happens in an f32 VMEM
    scratch across the innermost ("arbitrary") grid axis."""
    ky = pl.program_id(2)

    @pl.when(ky == 0)
    def _():
        acc_ref[...] = jnp.zeros_like(acc_ref)

    band = x_ref[0]                                     # (N, Wb, Cin)
    n, _, cin = band.shape
    for kx in range(3):
        slab = band[:, offs[kx]:offs[kx] + wo, :]       # (N, Wo, Cin)
        slab = slab.reshape(n * wo, cin).astype(jnp.bfloat16)
        acc_ref[...] += jnp.dot(slab, w_ref[0, kx],
                                preferred_element_type=jnp.float32)

    @pl.when(ky == 2)
    def _():
        out = jnp.maximum(acc_ref[...] + b_ref[...], 0.0)
        o_ref[0] = out.reshape(n, wo, -1).astype(o_ref.dtype)


# --------------------------- tiled fused matmul -------------------------------

def _pick_row_tile(m, n_col_tiles):
    """Largest row tile <= 512 that divides M (so jnp.pad never fires) while
    keeping the grid at >= 2 steps (v7x has two TensorCores)."""
    for tm in (512, 256, 128, 64, 32, 16, 8):
        if m % tm == 0 and not (m == tm and n_col_tiles == 1 and tm > 8):
            return tm, m
    mp = _round_up(m, 8)
    for tm in (512, 256, 128, 64, 32, 16, 8):
        if mp % tm == 0 and not (mp == tm and n_col_tiles == 1 and tm > 8):
            return tm, mp
    return 8, _round_up(m, 8)


def _prep_weight(w, scale, k_needed, coutp):
    """Fold BN scale into weight columns (f32), zero-pad K rows to match the
    (possibly channel-padded) activations and Cout to a lane-dense multiple of
    128, then cast to bf16 for the MXU."""
    k, cout = w.shape
    w = w.astype(jnp.float32) * scale.reshape(1, cout).astype(jnp.float32)
    w = jnp.pad(w, ((0, k_needed - k), (0, coutp - cout)))
    return w.astype(jnp.bfloat16)


def fused_matmul_bias(x2d, w2d, scale, bias, *, branch2=None, apply_relu=True,
                      out_dtype=jnp.float32):
    """Tiled fused matmul (+ optional second matmul branch) + bias [+ ReLU].

    rows = pixels, cols = channels.  Activations stay in their native dtype and
    are cast to bf16 inside the kernel; weights carry the folded BN scale.
    Returns (M, Coutp) with Coutp = round_up(Cout, 128); padded cols are zero.
    """
    m, k = x2d.shape
    cout = w2d.shape[1]
    coutp = _round_up(cout, 128)
    tn = 256 if coutp % 256 == 0 else 128
    n_ct = coutp // tn

    w_eff = _prep_weight(w2d, scale, k, coutp)
    b_eff = jnp.pad(bias.reshape(1, cout).astype(jnp.float32),
                    ((0, 0), (0, coutp - cout)))

    x_item = jnp.dtype(x2d.dtype).itemsize
    w_bytes = k * coutp * 2
    x_bytes = m * k * x_item

    x2 = w2_eff = None
    k2 = x2_item = 0
    if branch2 is not None:
        x2, w2b, s2b, b2b = branch2
        k2 = x2.shape[1]
        x2_item = jnp.dtype(x2.dtype).itemsize
        w2_eff = _prep_weight(w2b, s2b, k2, coutp)
        b_eff = b_eff + jnp.pad(b2b.reshape(1, cout).astype(jnp.float32),
                                ((0, 0), (0, coutp - cout)))
        w_bytes += k2 * coutp * 2
        x_bytes += m * k2 * x2_item

    tm, mp = _pick_row_tile(m, n_ct)
    n_mt = mp // tm
    if mp != m:  # rare: only when M is not a multiple of 8
        x2d = jnp.pad(x2d, ((0, mp - m), (0, 0)))
        if branch2 is not None:
            x2 = jnp.pad(x2, ((0, mp - m), (0, 0)))

    # Stationarity: keep the larger operand resident (not re-fetched).
    act_stationary = True
    if n_ct > 1 and n_mt > 1:
        act_stationary = n_mt * w_bytes <= n_ct * x_bytes

    if act_stationary:
        grid = (n_mt, n_ct)
        row = lambda a, b: a
        col = lambda a, b: b
    else:
        grid = (n_ct, n_mt)
        row = lambda a, b: b
        col = lambda a, b: a

    x_spec = pl.BlockSpec((tm, k), lambda a, b: (row(a, b), 0))
    w_spec = pl.BlockSpec((k, tn), lambda a, b: (0, col(a, b)))
    b_spec = pl.BlockSpec((1, tn), lambda a, b: (0, col(a, b)))
    o_spec = pl.BlockSpec((tm, tn), lambda a, b: (row(a, b), col(a, b)))

    out_item = jnp.dtype(out_dtype).itemsize
    flops = 2 * mp * k * coutp
    tile_bytes = 2 * (tm * k * x_item + k * tn * 2 + tn * 4 + tm * tn * out_item)

    in_specs = [x_spec, w_spec]
    args = [x2d, w_eff]
    if branch2 is not None:
        x2_spec = pl.BlockSpec((tm, k2), lambda a, b: (row(a, b), 0))
        w2_spec = pl.BlockSpec((k2, tn), lambda a, b: (0, col(a, b)))
        in_specs += [x2_spec, w2_spec]
        args += [x2, w2_eff]
        flops += 2 * mp * k2 * coutp
        tile_bytes += 2 * (tm * k2 * x2_item + k2 * tn * 2)
        kernel = functools.partial(_mm_bias_dual_kernel, apply_relu=apply_relu)
    else:
        kernel = functools.partial(_mm_bias_kernel, apply_relu=apply_relu)
    in_specs.append(b_spec)
    args.append(b_eff)

    # Count the re-fetched operand along the inner grid axis.
    if act_stationary:
        reads = x_bytes + (n_mt if n_ct > 1 else 1) * w_bytes
    else:
        reads = w_bytes + (n_ct if n_mt > 1 else 1) * x_bytes
    bytes_accessed = int(reads + coutp * 4 + mp * coutp * out_item)

    vmem_limit = int(min(64 * 2 ** 20, max(16 * 2 ** 20,
                                           2 * tile_bytes + 8 * 2 ** 20)))

    out = pl.pallas_call(
        kernel,
        out_shape=jax.ShapeDtypeStruct((mp, coutp), out_dtype),
        grid=grid,
        in_specs=in_specs,
        out_specs=o_spec,
        compiler_params=pltpu.CompilerParams(
            dimension_semantics=("parallel", "parallel"),
            vmem_limit_bytes=vmem_limit),
        cost_estimate=pl.CostEstimate(flops=int(flops), transcendentals=0,
                                      bytes_accessed=bytes_accessed),
    )(*args)

    if mp != m:
        out = out[:m]
    return out


# ----------------------------- 3x3 conv layer ---------------------------------

def conv3x3_bn_relu(x_hnwc, w_oihw, scale, bias, stride):
    """3x3 / pad=1 / stride conv + folded BN + ReLU, no im2col buffer.

    x_hnwc: (H, N, W, Cp) channel-padded bf16 activations (H outermost so the
    kernel picks its input row band purely via the BlockSpec index_map).
    Returns (Ho, N, Wo, Coutp) bf16 with Coutp = round_up(Cout, 128).
    """
    h, n, w, cp = x_hnwc.shape
    cout, cin = w_oihw.shape[0], w_oihw.shape[1]
    ho = (h - 1) // stride + 1
    wo = (w - 1) // stride + 1
    coutp = _round_up(cout, 128)
    tn = 256 if coutp % 256 == 0 else 128
    n_ct = coutp // tn

    # Fold BN scale into the weights (f32), pad cin -> Cp and cout -> Coutp.
    wk = jnp.transpose(w_oihw, (2, 3, 1, 0)).astype(jnp.float32)  # (ky,kx,ci,co)
    wk = wk * scale.reshape(1, 1, 1, cout).astype(jnp.float32)
    wk = jnp.pad(wk, ((0, 0), (0, 0), (0, cp - cin), (0, coutp - cout)))
    wk = wk.astype(jnp.bfloat16)
    b_eff = jnp.pad(bias.reshape(1, cout).astype(jnp.float32),
                    ((0, 0), (0, coutp - cout)))

    # Spatial pad=1; for stride 2, split W into even/odd phases so every
    # in-kernel kx slice is a contiguous window (no strided loads).
    xp = jnp.pad(x_hnwc, ((1, 1), (0, 0), (1, 1), (0, 0)))
    if stride == 1:
        x_band, offs = xp, (0, 1, 2)
    elif stride == 2:
        we = (w + 3) // 2                       # number of even cols in W + 2
        x_band = jnp.concatenate([xp[:, :, 0::2, :], xp[:, :, 1::2, :]], axis=2)
        offs = (0, we, 1)
    else:
        raise NotImplementedError("stride must be 1 or 2")
    wb = x_band.shape[2]
    # TODO(synk): multi-row banding (pl.Element blocks) would cut the ~3x
    # row-band re-read to ~1x; per-row bands already remove the 9x im2col.

    band_bytes = n * wb * cp * 2
    w_tap_bytes = 3 * cp * tn * 2
    out_blk_bytes = n * wo * tn * 2
    tile_bytes = (2 * (band_bytes + w_tap_bytes + tn * 4 + out_blk_bytes)
                  + n * wo * tn * 4)
    vmem_limit = int(min(64 * 2 ** 20, max(16 * 2 ** 20,
                                           2 * tile_bytes + 8 * 2 ** 20)))

    flops = 2 * (ho * n * wo) * (9 * cp) * coutp
    bytes_accessed = int(ho * n_ct * 3 * (band_bytes + w_tap_bytes)
                         + ho * n * wo * coutp * 2 + coutp * 4)

    return pl.pallas_call(
        functools.partial(_conv3x3_kernel, offs=offs, wo=wo),
        out_shape=jax.ShapeDtypeStruct((ho, n, wo, coutp), jnp.bfloat16),
        grid=(ho, n_ct, 3),
        in_specs=[
            pl.BlockSpec((1, n, wb, cp),
                         lambda oy, j, ky: (oy * stride + ky, 0, 0, 0)),
            pl.BlockSpec((1, 3, cp, tn), lambda oy, j, ky: (ky, 0, 0, j)),
            pl.BlockSpec((1, tn), lambda oy, j, ky: (0, j)),
        ],
        out_specs=pl.BlockSpec((1, n, wo, tn),
                               lambda oy, j, ky: (oy, 0, 0, j)),
        scratch_shapes=[pltpu.VMEM((n * wo, tn), jnp.float32)],
        compiler_params=pltpu.CompilerParams(
            dimension_semantics=("parallel", "parallel", "arbitrary"),
            vmem_limit_bytes=vmem_limit),
        cost_estimate=pl.CostEstimate(flops=int(flops), transcendentals=0,
                                      bytes_accessed=bytes_accessed),
    )(x_band, wk, b_eff)


# ------------------------------- JAX glue -------------------------------------

def _fold_bn(gamma, beta, mean, var, eps=1e-5):
    scale = gamma / jnp.sqrt(var + eps)
    return scale, beta - mean * scale


def init_params(key, in_channels, out_channels):
    """Deterministic synthetic parameters, PyTorch conv layout (Cout,Cin,kh,kw)."""
    c4 = out_channels * 4
    ks = jax.random.split(key, 20)

    def conv_w(k, cout, cin, kh, kw):
        return 0.1 * jax.random.normal(k, (cout, cin, kh, kw), jnp.float32)

    def bn(kg, kb, km, kv, c):
        gamma = 1.0 + 0.1 * jax.random.normal(kg, (c,), jnp.float32)
        beta = 0.1 * jax.random.normal(kb, (c,), jnp.float32)
        mean = 0.1 * jax.random.normal(km, (c,), jnp.float32)
        var = jnp.abs(jax.random.normal(kv, (c,), jnp.float32)) + 0.5
        return gamma, beta, mean, var

    return {
        "w1": conv_w(ks[0], out_channels, in_channels, 1, 1),
        "bn1": bn(ks[1], ks[2], ks[3], ks[4], out_channels),
        "w2": conv_w(ks[5], out_channels, out_channels, 3, 3),
        "bn2": bn(ks[6], ks[7], ks[8], ks[9], out_channels),
        "w3": conv_w(ks[10], c4, out_channels, 1, 1),
        "bn3": bn(ks[11], ks[12], ks[13], ks[14], c4),
        "w_sc": conv_w(ks[15], c4, in_channels, 1, 1),
        "bn_sc": bn(ks[16], ks[17], ks[18], ks[19], c4),
    }


def bottleneck_forward(x_nchw, p, strides):
    """Pallas-backed BottleNeck.forward (is_se=False, BN in inference mode)."""
    # (H, N, W, C) layout: H outermost so conv2's BlockSpec can pick row bands;
    # for the 1x1 convs the flattened row order only needs to be consistent.
    x_t = jnp.transpose(x_nchw, (2, 0, 3, 1)).astype(jnp.float32)
    h, n, w, cin = x_t.shape
    cmid = p["w1"].shape[0]
    c4 = 4 * cmid

    s1, b1 = _fold_bn(*p["bn1"])
    s2, b2 = _fold_bn(*p["bn2"])
    s3, b3 = _fold_bn(*p["bn3"])
    ssc, bsc = _fold_bn(*p["bn_sc"])

    # conv1: 1x1 stride 1 + BN + ReLU (bf16, channel-padded output).
    w1 = p["w1"][:, :, 0, 0].T                                    # (Cin, Cmid)
    out1 = fused_matmul_bias(x_t.reshape(h * n * w, cin), w1, s1, b1,
                             apply_relu=True, out_dtype=jnp.bfloat16)
    cp1 = out1.shape[1]
    out1 = out1.reshape(h, n, w, cp1)

    # conv2: 3x3 stride=strides pad=1 + BN + ReLU, no im2col buffer.
    out2 = conv3x3_bn_relu(out1, p["w2"], s2, b2, strides)
    ho, _, wo, cp2 = out2.shape

    # conv3 + BN3, shortcut (1x1 stride conv + BN) and the final ReLU fused in
    # ONE dual-matmul kernel: the 4*Cmid-wide shortcut never hits HBM.
    # TODO(synk): fold this strided shortcut gather into the dual kernel's x2
    # index_map (needs the same row-band machinery as conv2).
    xs = x_t[::strides, :, ::strides, :].reshape(ho * n * wo, cin)
    w3 = p["w3"][:, :, 0, 0].T                                    # (Cmid, 4*Cmid)
    w_sc = p["w_sc"][:, :, 0, 0].T                                # (Cin,  4*Cmid)
    out3 = fused_matmul_bias(out2.reshape(ho * n * wo, cp2), w3, s3, b3,
                             branch2=(xs, w_sc, ssc, bsc),
                             apply_relu=True, out_dtype=jnp.float32)
    out3 = out3.reshape(ho, n, wo, -1)[..., :c4]
    return jnp.transpose(out3, (1, 3, 0, 2))                      # NCHW


# --------------------------- pure-JAX reference --------------------------------

def _conv_nhwc(x, w_oihw, stride, padding):
    w_hwio = jnp.transpose(w_oihw, (2, 3, 1, 0))
    return jax.lax.conv_general_dilated(
        x, w_hwio, window_strides=(stride, stride),
        padding=[(padding, padding), (padding, padding)],
        dimension_numbers=("NHWC", "HWIO", "NHWC"),
        precision=jax.lax.Precision.HIGHEST)


def bottleneck_ref(x_nchw, p, strides):
    x = jnp.transpose(x_nchw, (0, 2, 3, 1)).astype(jnp.float32)

    def bn_apply(y, bnp):
        s, b = _fold_bn(*bnp)
        return y * s + b

    out = jax.nn.relu(bn_apply(_conv_nhwc(x, p["w1"], 1, 0), p["bn1"]))
    out = jax.nn.relu(bn_apply(_conv_nhwc(out, p["w2"], strides, 1), p["bn2"]))
    out = bn_apply(_conv_nhwc(out, p["w3"], 1, 0), p["bn3"])
    sc = bn_apply(_conv_nhwc(x, p["w_sc"], strides, 0), p["bn_sc"])
    out = jax.nn.relu(out + sc)
    return jnp.transpose(out, (0, 3, 1, 2))


# ----------------------------------- main --------------------------------------

if __name__ == "__main__":
    key = jax.random.PRNGKey(0)
    k_x, k_p = jax.random.split(key)

    N, in_channels, H, W = 2, 4, 16, 16
    out_channels = 8

    x = jax.random.normal(k_x, (N, in_channels, H, W), jnp.float32)   # NCHW
    params = init_params(k_p, in_channels, out_channels)

    fwd = jax.jit(bottleneck_forward, static_argnums=2)
    ref = jax.jit(bottleneck_ref, static_argnums=2)

    for strides in (2, 1):
        y = jax.block_until_ready(fwd(x, params, strides))
        y_ref = jax.block_until_ready(ref(x, params, strides))
        Ho = (H - 1) // strides + 1
        Wo = (W - 1) // strides + 1
        assert y.shape == (N, out_channels * 4, Ho, Wo), y.shape
        # bf16 MXU operands + bf16 inter-layer activations (f32 accumulate)
        # -> looser tolerance than a pure-f32 path.
        max_err = float(jnp.max(jnp.abs(y - y_ref)))
        assert jnp.allclose(y, y_ref, rtol=2e-2, atol=2e-2), max_err

    print("KERNEL_OK")
</pallas_src>

<mosaic_0001>
module attributes {stable_mosaic.version = 11 : i64} {
  func.func @_mm_bias_kernel(%arg0: i32, %arg1: i32, %arg2: memref<256x4xf32, #tpu.memory_space<vmem>>, %arg3: memref<4x128xbf16, #tpu.memory_space<vmem>>, %arg4: memref<1x128xf32, #tpu.memory_space<vmem>>, %arg5: memref<256x128xbf16, #tpu.memory_space<vmem>>) attributes {dimension_semantics = [#tpu.dimension_semantics<parallel>, #tpu.dimension_semantics<parallel>], iteration_bounds = array<i64: 2, 1>, scalar_prefetch = 0 : i64, scratch_operands = 0 : i64, tpu.core_type = #tpu.core_type<tc>, window_params = [{transform_indices = @transform_0, window_bounds = array<i64: 256, 4>}, {transform_indices = @transform_1, window_bounds = array<i64: 4, 128>}, {transform_indices = @transform_2, window_bounds = array<i64: 1, 128>}, {transform_indices = @transform_3, window_bounds = array<i64: 256, 128>}]} {
    %c0 = arith.constant 0 : index
    %c0_0 = arith.constant 0 : index
    %0 = vector.load %arg2[%c0, %c0_0] : memref<256x4xf32, #tpu.memory_space<vmem>>, vector<256x4xf32>
    %1 = arith.truncf %0 : vector<256x4xf32> to vector<256x4xbf16>
    %c0_1 = arith.constant 0 : index
    %c0_2 = arith.constant 0 : index
    %2 = vector.load %arg3[%c0_1, %c0_2] : memref<4x128xbf16, #tpu.memory_space<vmem>>, vector<4x128xbf16>
    %cst = arith.constant dense<0.000000e+00> : vector<256x128xf32>
    %3 = tpu.matmul %1, %2, %cst {dimension_numbers = #tpu.dot_dimension_numbers<[1], [0], [0], [1], [0, 0, 1, 1], [], []>} : vector<256x4xbf16>, vector<4x128xbf16>, vector<256x128xf32> -> vector<256x128xf32>
    %c0_3 = arith.constant 0 : index
    %c0_4 = arith.constant 0 : index
    %4 = vector.load %arg4[%c0_3, %c0_4] : memref<1x128xf32, #tpu.memory_space<vmem>>, vector<1x128xf32>
    %5 = vector.broadcast %4 : vector<1x128xf32> to vector<256x128xf32>
    %6 = arith.addf %3, %5 : vector<256x128xf32>
    %cst_5 = arith.constant 0.000000e+00 : f32
    %7 = vector.broadcast %cst_5 : f32 to vector<256x128xf32>
    %8 = arith.maximumf %6, %7 : vector<256x128xf32>
    %9 = arith.truncf %8 : vector<256x128xf32> to vector<256x128xbf16>
    %c0_6 = arith.constant 0 : index
    %c0_7 = arith.constant 0 : index
    %10 = vector.load %arg5[%c0_6, %c0_7] : memref<256x128xbf16, #tpu.memory_space<vmem>>, vector<256x128xbf16>
    tpu.vector_store %arg5[%c0_6, %c0_7], %9 {strides = array<i32>} : memref<256x128xbf16, #tpu.memory_space<vmem>>, vector<256x128xbf16>,
    return
  }
  func.func @transform_0(%arg0: i32, %arg1: i32) -> (i32, i32) {
    %c0_i32 = arith.constant 0 : i32
    %c0_i32_0 = arith.constant 0 : i32
    return %arg0, %c0_i32 : i32, i32
  }
  func.func @transform_1(%arg0: i32, %arg1: i32) -> (i32, i32) {
    %c0_i32 = arith.constant 0 : i32
    %c0_i32_0 = arith.constant 0 : i32
    return %c0_i32, %arg1 : i32, i32
  }
  func.func @transform_2(%arg0: i32, %arg1: i32) -> (i32, i32) {
    %c0_i32 = arith.constant 0 : i32
    %c0_i32_0 = arith.constant 0 : i32
    return %c0_i32, %arg1 : i32, i32
  }
  func.func @transform_3(%arg0: i32, %arg1: i32) -> (i32, i32) {
    %c0_i32 = arith.constant 0 : i32
    return %arg0, %arg1 : i32, i32
  }
}

module attributes {stable_mosaic.version = 11 : i64} {
  func.func @_conv3x3_kernel(%arg0: i32, %arg1: i32, %arg2: i32, %arg3: memref<1x2x18x128xbf16, #tpu.memory_space<vmem>>, %arg4: memref<1x3x128x128xbf16, #tpu.memory_space<vmem>>, %arg5: memref<1x128xf32, #tpu.memory_space<vmem>>, %arg6: memref<1x2x8x128xbf16, #tpu.memory_space<vmem>>, %arg7: memref<16x128xf32, #tpu.memory_space<vmem>>) attributes {dimension_semantics = [#tpu.dimension_semantics<parallel>, #tpu.dimension_semantics<parallel>, #tpu.dimension_semantics<arbitrary>], iteration_bounds = array<i64: 8, 1, 3>, scalar_prefetch = 0 : i64, scratch_operands = 1 : i64, tpu.core_type = #tpu.core_type<tc>, window_params = [{transform_indices = @transform_0, window_bounds = array<i64: 1, 2, 18, 128>}, {transform_indices = @transform_1, window_bounds = array<i64: 1, 3, 128, 128>}, {transform_indices = @transform_2, window_bounds = array<i64: 1, 128>}, {transform_indices = @transform_3, window_bounds = array<i64: 1, 2, 8, 128>}]} {
    %c0_i32 = arith.constant 0 : i32
    %0 = arith.cmpi eq, %arg2, %c0_i32 : i32
    %1 = arith.extui %0 : i1 to i32
    %c0_i32_0 = arith.constant 0 : i32
    %2 = arith.cmpi ne, %1, %c0_i32_0 : i32
    scf.if %2 {
      %cst_29 = arith.constant 0.000000e+00 : f32
      %32 = vector.broadcast %cst_29 : f32 to vector<16x128xf32>
      %c0_30 = arith.constant 0 : index
      %c0_31 = arith.constant 0 : index
      %33 = vector.load %arg7[%c0_30, %c0_31] : memref<16x128xf32, #tpu.memory_space<vmem>>, vector<16x128xf32>
      tpu.vector_store %arg7[%c0_30, %c0_31], %32 {strides = array<i32>} : memref<16x128xf32, #tpu.memory_space<vmem>>, vector<16x128xf32>,
    } else {
    }
    %c0 = arith.constant 0 : index
    %c0_1 = arith.constant 0 : index
    %c0_2 = arith.constant 0 : index
    %c0_3 = arith.constant 0 : index
    %3 = vector.load %arg3[%c0, %c0_1, %c0_2, %c0_3] : memref<1x2x18x128xbf16, #tpu.memory_space<vmem>>, vector<1x2x18x128xbf16>
    %4 = vector.shape_cast %3 : vector<1x2x18x128xbf16> to vector<2x18x128xbf16>
    %5 = vector.extract_strided_slice %4 {offsets = [0, 0, 0], sizes = [2, 8, 128], strides = [1, 1, 1]} : vector<2x18x128xbf16> to vector<2x8x128xbf16>
    %6 = vector.shape_cast %5 : vector<2x8x128xbf16> to vector<16x128xbf16>
    %c0_4 = arith.constant 0 : index
    %c0_5 = arith.constant 0 : index
    %7 = vector.load %arg7[%c0_4, %c0_5] : memref<16x128xf32, #tpu.memory_space<vmem>>, vector<16x128xf32>
    %c0_6 = arith.constant 0 : index
    %c0_7 = arith.constant 0 : index
    %c0_8 = arith.constant 0 : index
    %c0_9 = arith.constant 0 : index
    %8 = vector.load %arg4[%c0_6, %c0_7, %c0_8, %c0_9] : memref<1x3x128x128xbf16, #tpu.memory_space<vmem>>, vector<1x1x128x128xbf16>
    %9 = vector.shape_cast %8 : vector<1x1x128x128xbf16> to vector<128x128xbf16>
    %cst = arith.constant dense<0.000000e+00> : vector<16x128xf32>
    %10 = tpu.matmul %6, %9, %cst {dimension_numbers = #tpu.dot_dimension_numbers<[1], [0], [0], [1], [0, 0, 1, 1], [], []>} : vector<16x128xbf16>, vector<128x128xbf16>, vector<16x128xf32> -> vector<16x128xf32>
    %11 = arith.addf %7, %10 : vector<16x128xf32>
    %c0_10 = arith.constant 0 : index
    %c0_11 = arith.constant 0 : index
    %12 = vector.load %arg7[%c0_10, %c0_11] : memref<16x128xf32, #tpu.memory_space<vmem>>, vector<16x128xf32>
    tpu.vector_store %arg7[%c0_10, %c0_11], %11 {strides = array<i32>} : memref<16x128xf32, #tpu.memory_space<vmem>>, vector<16x128xf32>,
    %13 = vector.extract_strided_slice %4 {offsets = [0, 9, 0], sizes = [2, 8, 128], strides = [1, 1, 1]} : vector<2x18x128xbf16> to vector<2x8x128xbf16>
    %14 = vector.shape_cast %13 : vector<2x8x128xbf16> to vector<16x128xbf16>
    %c0_12 = arith.constant 0 : index
    %c0_13 = arith.constant 0 : index
    %15 = vector.load %arg7[%c0_12, %c0_13] : memref<16x128xf32, #tpu.memory_space<vmem>>, vector<16x128xf32>
    %c0_14 = arith.constant 0 : index
    %c1 = arith.constant 1 : index
    %c0_15 = arith.constant 0 : index
    %c0_16 = arith.constant 0 : index
    %16 = vector.load %arg4[%c0_14, %c1, %c0_15, %c0_16] : memref<1x3x128x128xbf16, #tpu.memory_space<vmem>>, vector<1x1x128x128xbf16>
    %17 = vector.shape_cast %16 : vector<1x1x128x128xbf16> to vector<128x128xbf16>
    %cst_17 = arith.constant dense<0.000000e+00> : vector<16x128xf32>
    %18 = tpu.matmul %14, %17, %cst_17 {dimension_numbers = #tpu.dot_dimension_numbers<[1], [0], [0], [1], [0, 0, 1, 1], [], []>} : vector<16x128xbf16>, vector<128x128xbf16>, vector<16x128xf32> -> vector<16x128xf32>
    %19 = arith.addf %15, %18 : vector<16x128xf32>
    %c0_18 = arith.constant 0 : index
    %c0_19 = arith.constant 0 : index
    %20 = vector.load %arg7[%c0_18, %c0_19] : memref<16x128xf32, #tpu.memory_space<vmem>>, vector<16x128xf32>
    tpu.vector_store %arg7[%c0_18, %c0_19], %19 {strides = array<i32>} : memref<16x128xf32, #tpu.memory_space<vmem>>, vector<16x128xf32>,
    %21 = vector.extract_strided_slice %4 {offsets = [0, 1, 0], sizes = [2, 8, 128], strides = [1, 1, 1]} : vector<2x18x128xbf16> to vector<2x8x128xbf16>
    %22 = vector.shape_cast %21 : vector<2x8x128xbf16> to vector<16x128xbf16>
    %c0_20 = arith.constant 0 : index
    %c0_21 = arith.constant 0 : index
    %23 = vector.load %arg7[%c0_20, %c0_21] : memref<16x128xf32, #tpu.memory_space<vmem>>, vector<16x128xf32>
    %c0_22 = arith.constant 0 : index
    %c2 = arith.constant 2 : index
    %c0_23 = arith.constant 0 : index
    %c0_24 = arith.constant 0 : index
    %24 = vector.load %arg4[%c0_22, %c2, %c0_23, %c0_24] : memref<1x3x128x128xbf16, #tpu.memory_space<vmem>>, vector<1x1x128x128xbf16>
    %25 = vector.shape_cast %24 : vector<1x1x128x128xbf16> to vector<128x128xbf16>
    %cst_25 = arith.constant dense<0.000000e+00> : vector<16x128xf32>
    %26 = tpu.matmul %22, %25, %cst_25 {dimension_numbers = #tpu.dot_dimension_numbers<[1], [0], [0], [1], [0, 0, 1, 1], [], []>} : vector<16x128xbf16>, vector<128x128xbf16>, vector<16x128xf32> -> vector<16x128xf32>
    %27 = arith.addf %23, %26 : vector<16x128xf32>
    %c0_26 = arith.constant 0 : index
    %c0_27 = arith.constant 0 : index
    %28 = vector.load %arg7[%c0_26, %c0_27] : memref<16x128xf32, #tpu.memory_space<vmem>>, vector<16x128xf32>
    tpu.vector_store %arg7[%c0_26, %c0_27], %27 {strides = array<i32>} : memref<16x128xf32, #tpu.memory_space<vmem>>, vector<16x128xf32>,
    %c2_i32 = arith.constant 2 : i32
    %29 = arith.cmpi eq, %arg2, %c2_i32 : i32
    %30 = arith.extui %29 : i1 to i32
    %c0_i32_28 = arith.constant 0 : i32
    %31 = arith.cmpi ne, %30, %c0_i32_28 : i32
    scf.if %31 {
      %c0_29 = arith.constant 0 : index
      %c0_30 = arith.constant 0 : index
      %32 = vector.load %arg7[%c0_29, %c0_30] : memref<16x128xf32, #tpu.memory_space<vmem>>, vector<16x128xf32>
      %c0_31 = arith.constant 0 : index
      %c0_32 = arith.constant 0 : index
      %33 = vector.load %arg5[%c0_31, %c0_32] : memref<1x128xf32, #tpu.memory_space<vmem>>, vector<1x128xf32>
      %34 = vector.broadcast %33 : vector<1x128xf32> to vector<16x128xf32>
      %35 = arith.addf %32, %34 : vector<16x128xf32>
      %cst_33 = arith.constant 0.000000e+00 : f32
      %36 = vector.broadcast %cst_33 : f32 to vector<16x128xf32>
      %37 = arith.maximumf %35, %36 : vector<16x128xf32>
      %38 = vector.shape_cast %37 : vector<16x128xf32> to vector<2x8x128xf32>
      %39 = arith.truncf %38 : vector<2x8x128xf32> to vector<2x8x128xbf16>
      %c0_34 = arith.constant 0 : index
      %c0_35 = arith.constant 0 : index
      %c0_36 = arith.constant 0 : index
      %c0_37 = arith.constant 0 : index
      %40 = vector.load %arg6[%c0_34, %c0_35, %c0_36, %c0_37] : memref<1x2x8x128xbf16, #tpu.memory_space<vmem>>, vector<1x2x8x128xbf16>
      %41 = vector.shape_cast %40 : vector<1x2x8x128xbf16> to vector<2x8x128xbf16>
      %42 = vector.shape_cast %39 : vector<2x8x128xbf16> to vector<1x2x8x128xbf16>
      tpu.vector_store %arg6[%c0_34, %c0_35, %c0_36, %c0_37], %42 {strides = array<i32>} : memref<1x2x8x128xbf16, #tpu.memory_space<vmem>>, vector<1x2x8x128xbf16>,
    } else {
    }
    return
  }
  func.func @transform_0(%arg0: i32, %arg1: i32, %arg2: i32) -> (i32, i32, i32, i32) {
    %c2_i32 = arith.constant 2 : i32
    %0 = arith.muli %arg0, %c2_i32 : i32
    %1 = arith.addi %0, %arg2 : i32
    %c0_i32 = arith.constant 0 : i32
    %c0_i32_0 = arith.constant 0 : i32
    %c0_i32_1 = arith.constant 0 : i32
    %c0_i32_2 = arith.constant 0 : i32
    return %1, %c0_i32, %c0_i32_0, %c0_i32_1 : i32, i32, i32, i32
  }
  func.func @transform_1(%arg0: i32, %arg1: i32, %arg2: i32) -> (i32, i32, i32, i32) {
    %c0_i32 = arith.constant 0 : i32
    %c0_i32_0 = arith.constant 0 : i32
    %c0_i32_1 = arith.constant 0 : i32
    return %arg2, %c0_i32, %c0_i32_0, %arg1 : i32, i32, i32, i32
  }
  func.func @transform_2(%arg0: i32, %arg1: i32, %arg2: i32) -> (i32, i32) {
    %c0_i32 = arith.constant 0 : i32
    %c0_i32_0 = arith.constant 0 : i32
    return %c0_i32, %arg1 : i32, i32
  }
  func.func @transform_3(%arg0: i32, %arg1: i32, %arg2: i32) -> (i32, i32, i32, i32) {
    %c0_i32 = arith.constant 0 : i32
    %c0_i32_0 = arith.constant 0 : i32
    %c0_i32_1 = arith.constant 0 : i32
    return %arg0, %c0_i32, %c0_i32_0, %arg1 : i32, i32, i32, i32
  }
}

module attributes {stable_mosaic.version = 11 : i64} {
  func.func @_mm_bias_dual_kernel(%arg0: i32, %arg1: i32, %arg2: memref<64x128xbf16, #tpu.memory_space<vmem>>, %arg3: memref<128x128xbf16, #tpu.memory_space<vmem>>, %arg4: memref<64x4xf32, #tpu.memory_space<vmem>>, %arg5: memref<4x128xbf16, #tpu.memory_space<vmem>>, %arg6: memref<1x128xf32, #tpu.memory_space<vmem>>, %arg7: memref<64x128xf32, #tpu.memory_space<vmem>>) attributes {dimension_semantics = [#tpu.dimension_semantics<parallel>, #tpu.dimension_semantics<parallel>], iteration_bounds = array<i64: 2, 1>, scalar_prefetch = 0 : i64, scratch_operands = 0 : i64, tpu.core_type = #tpu.core_type<tc>, window_params = [{transform_indices = @transform_0, window_bounds = array<i64: 64, 128>}, {transform_indices = @transform_1, window_bounds = array<i64: 128, 128>}, {transform_indices = @transform_2, window_bounds = array<i64: 64, 4>}, {transform_indices = @transform_3, window_bounds = array<i64: 4, 128>}, {transform_indices = @transform_4, window_bounds = array<i64: 1, 128>}, {transform_indices = @transform_5, window_bounds = array<i64: 64, 128>}]} {
    %c0 = arith.constant 0 : index
    %c0_0 = arith.constant 0 : index
    %0 = vector.load %arg2[%c0, %c0_0] : memref<64x128xbf16, #tpu.memory_space<vmem>>, vector<64x128xbf16>
    %c0_1 = arith.constant 0 : index
    %c0_2 = arith.constant 0 : index
    %1 = vector.load %arg3[%c0_1, %c0_2] : memref<128x128xbf16, #tpu.memory_space<vmem>>, vector<128x128xbf16>
    %cst = arith.constant dense<0.000000e+00> : vector<64x128xf32>
    %2 = tpu.matmul %0, %1, %cst {dimension_numbers = #tpu.dot_dimension_numbers<[1], [0], [0], [1], [0, 0, 1, 1], [], []>} : vector<64x128xbf16>, vector<128x128xbf16>, vector<64x128xf32> -> vector<64x128xf32>
    %c0_3 = arith.constant 0 : index
    %c0_4 = arith.constant 0 : index
    %3 = vector.load %arg4[%c0_3, %c0_4] : memref<64x4xf32, #tpu.memory_space<vmem>>, vector<64x4xf32>
    %4 = arith.truncf %3 : vector<64x4xf32> to vector<64x4xbf16>
    %c0_5 = arith.constant 0 : index
    %c0_6 = arith.constant 0 : index
    %5 = vector.load %arg5[%c0_5, %c0_6] : memref<4x128xbf16, #tpu.memory_space<vmem>>, vector<4x128xbf16>
    %cst_7 = arith.constant dense<0.000000e+00> : vector<64x128xf32>
    %6 = tpu.matmul %4, %5, %cst_7 {dimension_numbers = #tpu.dot_dimension_numbers<[1], [0], [0], [1], [0, 0, 1, 1], [], []>} : vector<64x4xbf16>, vector<4x128xbf16>, vector<64x128xf32> -> vector<64x128xf32>
    %7 = arith.addf %2, %6 : vector<64x128xf32>
    %c0_8 = arith.constant 0 : index
    %c0_9 = arith.constant 0 : index
    %8 = vector.load %arg6[%c0_8, %c0_9] : memref<1x128xf32, #tpu.memory_space<vmem>>, vector<1x128xf32>
    %9 = vector.broadcast %8 : vector<1x128xf32> to vector<64x128xf32>
    %10 = arith.addf %7, %9 : vector<64x128xf32>
    %cst_10 = arith.constant 0.000000e+00 : f32
    %11 = vector.broadcast %cst_10 : f32 to vector<64x128xf32>
    %12 = arith.maximumf %10, %11 : vector<64x128xf32>
    %c0_11 = arith.constant 0 : index
    %c0_12 = arith.constant 0 : index
    %13 = vector.load %arg7[%c0_11, %c0_12] : memref<64x128xf32, #tpu.memory_space<vmem>>, vector<64x128xf32>
    tpu.vector_store %arg7[%c0_11, %c0_12], %12 {strides = array<i32>} : memref<64x128xf32, #tpu.memory_space<vmem>>, vector<64x128xf32>,
    return
  }
  func.func @transform_0(%arg0: i32, %arg1: i32) -> (i32, i32) {
    %c0_i32 = arith.constant 0 : i32
    %c0_i32_0 = arith.constant 0 : i32
    return %arg0, %c0_i32 : i32, i32
  }
  func.func @transform_1(%arg0: i32, %arg1: i32) -> (i32, i32) {
    %c0_i32 = arith.constant 0 : i32
    %c0_i32_0 = arith.constant 0 : i32
    return %c0_i32, %arg1 : i32, i32
  }
  func.func @transform_2(%arg0: i32, %arg1: i32) -> (i32, i32) {
    %c0_i32 = arith.constant 0 : i32
    %c0_i32_0 = arith.constant 0 : i32
    return %arg0, %c0_i32 : i32, i32
  }
  func.func @transform_3(%arg0: i32, %arg1: i32) -> (i32, i32) {
    %c0_i32 = arith.constant 0 : i32
    %c0_i32_0 = arith.constant 0 : i32
    return %c0_i32, %arg1 : i32, i32
  }
  func.func @transform_4(%arg0: i32, %arg1: i32) -> (i32, i32) {
    %c0_i32 = arith.constant 0 : i32
    %c0_i32_0 = arith.constant 0 : i32
    return %c0_i32, %arg1 : i32, i32
  }
  func.func @transform_5(%arg0: i32, %arg1: i32) -> (i32, i32) {
    %c0_i32 = arith.constant 0 : i32
    return %arg0, %arg1 : i32, i32
  }
}

</mosaic_0001>

<llo_original>
// kernel: bottleneck_forward.3
$region0: #{bottleneck_forward.3}
  #allocation0 [shape = 'u32[]', space=smem, size = 0x4, offset = 0x4, fixed_abs, tag = 'smem constant byte address 0x4 - core index']
  #allocation1 [shape = 'u32[144,128]{1,0:T(1,128)}', space=vmem, size = 0x12000, scoped, tag = 'internal scratch']
  %s0 = inlined_call_operand.vmem [shape: f32[512,4], index: 0, kind: input, shape index: {}]
  %s1 = inlined_call_operand.vmem [shape: bf16[4,128], index: 1, kind: input, shape index: {}]
  %s2 = inlined_call_operand.vmem [shape: f32[1,128], index: 2, kind: input, shape index: {}]
  %s3 = inlined_call_operand.vmem [shape: bf16[512,128], index: 3, kind: output, shape index: {}]
  %s4 = sld [smem:[#allocation0]]
  $region45: #{bottleneck_forward.3} parent=0
    _
  %s6 = ssub.s32 1, %s4
  %s7 = scalar_select 0, %s6, %s4
  loop: start=0, step=1, limit=4
  $region2: #{bottleneck_forward.3} parent=0 // loop_pre_header
    _
  $region3: #{bottleneck_forward.3} parent=0 // loop_header
    %s9 = sphi 0, %s13
    %p10 = scmp.ge.s32.totalorder %s9, 4
    %s16 = sphi 0, %s28
    %s17 = sphi 0, %s24
    %s18 = sphi 0, %s16
    %s19 = sphi 0, %s17
    %s20 = sphi 0, %s18
    %s21 = sphi 0, %s19
    %s31 = sphi 0, %s33
    %s34 = sphi 0, %s31
    %s35 = sphi 0, %s34
    %s51 = sphi 0, %s35
    %s57 = sphi 0, %s59
    %s60 = sphi 0, %s57
    %s61 = sphi 0, %s60
    %s77 = sphi 0, %s61
    %s83 = sphi 0, %s85
    %s86 = sphi 0, %s83
    %s87 = sphi 0, %s86
    %s103 = sphi 0, %s87
    %s111 = sphi 0, %s113
    %s114 = sphi 0, %s111
    %s115 = sphi 0, %s114
    %s131 = sphi 0, %s115
  $region4: #{bottleneck_forward.3} parent=0 // loop_header_branch
    %12 = sbr.rel (%p10) target = $region8
  $region5: #{bottleneck_forward.3} parent=0 // loop_body
    %s14 = ssub.s32 %s9, 1
    %s15 = ssub.s32 %s9, 2
    %s22 = sadd.s32 1, %s17
    %p23 = scmp.ge.s32.totalorder %s22, 1
    %s24 = scalar_select %p23, 0, %s22
    %s25 = sadd.s32 1, %s16
    %s26 = scalar_select %p23, %s25, %s16
    %p27 = scmp.ge.s32.totalorder %s26, 2
    %s28 = scalar_select %p27, 0, %s26
    %s29 = ssub.s32 %s16, %s28
    %p30 = scmp.eq.s32.totalorder %s29, 0
    %s32 = sadd.s32 %s31, 1
    %s33 = scalar_select %p30, %s31, %s32
    %p36 = pneg %p30
    %p37 = scmp.eq.s32.totalorder %s9, 1
    %p38 = por %p36, %p37
    %p39 = scmp.ne.s32.totalorder %s31, %s34
    %p40 = scmp.eq.s32.totalorder %s9, 0
    %p41 = por %p39, %p40
    %p42 = scmp.ne.s32.totalorder %s31, %s34
    %p43 = scmp.eq.s32.totalorder %s14, 1
    %p44 = por %p42, %p43
    %p45 = scmp.ne.s32.totalorder %s34, %s35
    %p46 = scmp.eq.s32.totalorder %s14, 0
    %p47 = por %p45, %p46
    %p48 = scmp.ne.s32.totalorder %s34, %s35
    %p49 = scmp.eq.s32.totalorder %s15, 1
    %p50 = por %p48, %p49
    %p52 = scmp.ne.s32.totalorder %s35, %s51
    %p53 = scmp.eq.s32.totalorder %s15, 0
    %p54 = por %p52, %p53
    %s55 = ssub.s32 %s17, %s24
    %p56 = scmp.eq.s32.totalorder %s55, 0
    %s58 = sadd.s32 %s57, 1
    %s59 = scalar_select %p56, %s57, %s58
    %p62 = pneg %p56
    %p63 = scmp.eq.s32.totalorder %s9, 1
    %p64 = por %p62, %p63
    %p65 = scmp.ne.s32.totalorder %s57, %s60
    %p66 = scmp.eq.s32.totalorder %s9, 0
    %p67 = por %p65, %p66
    %p68 = scmp.ne.s32.totalorder %s57, %s60
    %p69 = scmp.eq.s32.totalorder %s14, 1
    %p70 = por %p68, %p69
    %p71 = scmp.ne.s32.totalorder %s60, %s61
    %p72 = scmp.eq.s32.totalorder %s14, 0
    %p73 = por %p71, %p72
    %p74 = scmp.ne.s32.totalorder %s60, %s61
    %p75 = scmp.eq.s32.totalorder %s15, 1
    %p76 = por %p74, %p75
    %p78 = scmp.ne.s32.totalorder %s61, %s77
    %p79 = scmp.eq.s32.totalorder %s15, 0
    %p80 = por %p78, %p79
    %s81 = ssub.s32 %s17, %s24
    %p82 = scmp.eq.s32.totalorder %s81, 0
    %s84 = sadd.s32 %s83, 1
    %s85 = scalar_select %p82, %s83, %s84
    %p88 = pneg %p82
    %p89 = scmp.eq.s32.totalorder %s9, 1
    %p90 = por %p88, %p89
    %p91 = scmp.ne.s32.totalorder %s83, %s86
    %p92 = scmp.eq.s32.totalorder %s9, 0
    %p93 = por %p91, %p92
    %p94 = scmp.ne.s32.totalorder %s83, %s86
    %p95 = scmp.eq.s32.totalorder %s14, 1
    %p96 = por %p94, %p95
    %p97 = scmp.ne.s32.totalorder %s86, %s87
    %p98 = scmp.eq.s32.totalorder %s14, 0
    %p99 = por %p97, %p98
    %p100 = scmp.ne.s32.totalorder %s86, %s87
    %p101 = scmp.eq.s32.totalorder %s15, 1
    %p102 = por %p100, %p101
    %p104 = scmp.ne.s32.totalorder %s87, %s103
    %p105 = scmp.eq.s32.totalorder %s15, 0
    %p106 = por %p104, %p105
    %s107 = ssub.s32 %s16, %s28
    %s108 = ssub.s32 %s17, %s24
    %s109 = sor.u32 %s107, %s108
    %p110 = scmp.eq.s32.totalorder %s109, 0
    %s112 = sadd.s32 %s111, 1
    %s113 = scalar_select %p110, %s111, %s112
    %p116 = pneg %p110
    %p117 = scmp.eq.s32.totalorder %s9, 1
    %p118 = por %p116, %p117
    %p119 = scmp.ne.s32.totalorder %s111, %s114
    %p120 = scmp.eq.s32.totalorder %s9, 0
    %p121 = por %p119, %p120
    %p122 = scmp.ne.s32.totalorder %s111, %s114
    %p123 = scmp.eq.s32.totalorder %s14, 1
    %p124 = por %p122, %p123
    %p125 = scmp.ne.s32.totalorder %s114, %s115
    %p126 = scmp.eq.s32.totalorder %s14, 0
    %p127 = por %p125, %p126
    %p128 = scmp.ne.s32.totalorder %s114, %s115
    %p129 = scmp.eq.s32.totalorder %s15, 1
    %p130 = por %p128, %p129
    %p132 = scmp.ne.s32.totalorder %s115, %s131
    %p133 = scmp.eq.s32.totalorder %s15, 0
    %p134 = por %p132, %p133
    %p135 = scmp.le.s32.totalorder 1, %s9
    %p136 = scmp.lt.s32.totalorder %s9, 3
    %p137 = pnand %p135, %p136
    %p138 = pneg %p137
    // Predicated region
    $region9: #{bottleneck_forward.3} parent=5 // pred_check
      _
    $region10: #{bottleneck_forward.3} parent=5 // pred_check_branch
      %140 = sbr.rel (%p137) target = $region12
    $region11: #{bottleneck_forward.3} parent=5 // pred_region
      %s141 = ssub.s32 %s9, 1
      // Predicated region
      $region13: #{bottleneck_forward.3} parent=11 // pred_check
        %p142 = pneg %p73
      $region14: #{bottleneck_forward.3} parent=11 // pred_check_branch
        %144 = sbr.rel (%p142) target = $region16
      $region15: #{bottleneck_forward.3} parent=11 // pred_region
        %p145 = scmp.lt.s32.totalorder %s19, 0
        %s146 = scalar_select %p145, %s19, 0
        %s147 = smul.addr %s146, 2
        %s148 = scalar_lea.vmem %s1, %s147
      $region16: #{bottleneck_forward.3} parent=11 // pred_fallthru
        _
      // Predicated region
      $region17: #{bottleneck_forward.3} parent=11 // pred_check
        %p149 = pneg %p99
      $region18: #{bottleneck_forward.3} parent=11 // pred_check_branch
        %151 = sbr.rel (%p149) target = $region20
      $region19: #{bottleneck_forward.3} parent=11 // pred_region
        %p152 = scmp.lt.s32.totalorder %s19, 0
        %s153 = scalar_select %p152, %s19, 0
        %s154 = scalar_lea.vmem %s2, %s153
      $region20: #{bottleneck_forward.3} parent=11 // pred_fallthru
        _
    $region12: #{bottleneck_forward.3} parent=5 // pred_fallthru
      _
    %p155 = scmp.lt.s32.totalorder %s9, 2
    // Predicated region
    $region21: #{bottleneck_forward.3} parent=5 // pred_check
      %p156 = pneg %p155
    $region22: #{bottleneck_forward.3} parent=5 // pred_check_branch
      %158 = sbr.rel (%p156) target = $region24
    $region23: #{bottleneck_forward.3} parent=5 // pred_region
      // Predicated region
      $region25: #{bottleneck_forward.3} parent=23 // pred_check
        %p159 = pneg %p41
      $region26: #{bottleneck_forward.3} parent=23 // pred_check_branch
        %161 = sbr.rel (%p159) target = $region28
      $region27: #{bottleneck_forward.3} parent=23 // pred_region
        %s162 = smul.u32 32, %s16
        %p163 = scmp.lt.s32.totalorder %s162, 63
        %s164 = scalar_select %p163, %s162, 63
        %s165 = smul.addr %s164, 8
        %s166 = scalar_lea.vmem %s0, %s165
        %s167 = smul.u32 32, %s16
      $region28: #{bottleneck_forward.3} parent=23 // pred_fallthru
        _
    $region24: #{bottleneck_forward.3} parent=5 // pred_fallthru
      _
    %p168 = scmp.le.s32.totalorder 1, %s9
    %p169 = scmp.lt.s32.totalorder %s9, 3
    %p170 = pnand %p168, %p169
    %p171 = pneg %p170
    // Predicated region
    $region29: #{bottleneck_forward.3} parent=5 // pred_check
      _
    $region30: #{bottleneck_forward.3} parent=5 // pred_check_branch
      %173 = sbr.rel (%p170) target = $region32
    $region31: #{bottleneck_forward.3} parent=5 // pred_region
      %s174 = ssub.s32 %s9, 1
      %s175 = smul.u32 32, %s18
      %p176 = scmp.lt.s32.totalorder %s175, 63
      %s177 = scalar_select %p176, %s175, 63
      %s178 = smul.addr %s177, 8
      %s179 = scalar_lea.vmem %s0, %s178
      %p180 = pneg %p47
      %p181 = pneg %p44
      %p182 = scmp.lt.s32.totalorder %s19, 0
      %s183 = scalar_select %p182, %s19, 0
      %s184 = smul.addr %s183, 2
      %s185 = scalar_lea.vmem %s1, %s184
      %p186 = pneg %p73
      %p187 = pneg %p70
      %p188 = scmp.lt.s32.totalorder %s19, 0
      %s189 = scalar_select %p188, %s19, 0
      %s190 = scalar_lea.vmem %s2, %s189
      %p191 = pneg %p99
      %p192 = pneg %p96
      %p193 = pneg %p127
      %p194 = pneg %p124
      %s195 = smul.u32 32, %s18
      %p196 = scmp.lt.s32.totalorder %s195, 63
      %s197 = scalar_select %p196, %s195, 63
      %p198 = scmp.lt.s32.totalorder %s19, 0
      %s199 = scalar_select %p198, %s19, 0
      %s200 = sadd.s32 %s199, %s197
      %s201 = smul.addr %s200, 4
      %s202 = scalar_lea.vmem %s3, %s201
      %s203 = smul.u32 32, %s18
      %p204 = scmp.lt.s32.totalorder %s203, 63
      %s205 = scalar_select %p204, %s203, 63
      %s206 = smul.addr %s205, 8
      %s207 = scalar_lea.vmem %s0, %s206
      %s208 = smul.u32 32, %s18
      %p209 = scmp.lt.s32.totalorder %s19, 0
      %s210 = scalar_select %p209, %s19, 0
      %s211 = smul.addr %s210, 2
      %s212 = scalar_lea.vmem %s1, %s211
      %p213 = scmp.lt.s32.totalorder %s19, 0
      %s214 = scalar_select %p213, %s19, 0
      %s215 = scalar_lea.vmem %s2, %s214
      %s216 = smul.u32 32, %s18
      %p217 = scmp.lt.s32.totalorder %s216, 63
      %s218 = scalar_select %p217, %s216, 63
      %p219 = scmp.lt.s32.totalorder %s19, 0
      %s220 = scalar_select %p219, %s19, 0
      %s221 = sadd.s32 %s220, %s218
      %s222 = smul.addr %s221, 4
      %s223 = scalar_lea.vmem %s3, %s222
      %s224 = smul.u32 32, %s18
      %v226 = vld [vmem:[%s207] sm:$0xff]
      %v227 = vld [vmem:[%s207 + $0x8] sm:$0xff]
      %v228 = vld [vmem:[%s207 + $0x10] sm:$0xff]
      %v229 = vld [vmem:[%s207 + $0x18] sm:$0xff]
      %v230 = vld [vmem:[%s207 + $0x20] sm:$0xff]
      %v231 = vld [vmem:[%s207 + $0x28] sm:$0xff]
      %v232 = vld [vmem:[%s207 + $0x30] sm:$0xff]
      %v233 = vld [vmem:[%s207 + $0x38] sm:$0xff]
      %v234 = vld [vmem:[%s207 + $0x40] sm:$0xff]
      %v235 = vld [vmem:[%s207 + $0x48] sm:$0xff]
      %v236 = vld [vmem:[%s207 + $0x50] sm:$0xff]
      %v237 = vld [vmem:[%s207 + $0x58] sm:$0xff]
      %v238 = vld [vmem:[%s207 + $0x60] sm:$0xff]
      %v239 = vld [vmem:[%s207 + $0x68] sm:$0xff]
      %v240 = vld [vmem:[%s207 + $0x70] sm:$0xff]
      %v241 = vld [vmem:[%s207 + $0x78] sm:$0xff]
      %v242 = vld [vmem:[%s207 + $0x80] sm:$0xff]
      %v243 = vld [vmem:[%s207 + $0x88] sm:$0xff]
      %v244 = vld [vmem:[%s207 + $0x90] sm:$0xff]
      %v245 = vld [vmem:[%s207 + $0x98] sm:$0xff]
      %v246 = vld [vmem:[%s207 + $0xa0] sm:$0xff]
      %v247 = vld [vmem:[%s207 + $0xa8] sm:$0xff]
      %v248 = vld [vmem:[%s207 + $0xb0] sm:$0xff]
      %v249 = vld [vmem:[%s207 + $0xb8] sm:$0xff]
      %v250 = vld [vmem:[%s207 + $0xc0] sm:$0xff]
      %v251 = vld [vmem:[%s207 + $0xc8] sm:$0xff]
      %v252 = vld [vmem:[%s207 + $0xd0] sm:$0xff]
      %v253 = vld [vmem:[%s207 + $0xd8] sm:$0xff]
      %v254 = vld [vmem:[%s207 + $0xe0] sm:$0xff]
      %v255 = vld [vmem:[%s207 + $0xe8] sm:$0xff]
      %v256 = vld [vmem:[%s207 + $0xf0] sm:$0xff]
      %v257 = vld [vmem:[%s207 + $0xf8] sm:$0xff]
      %v258 = vpack.c.bf16 %v227, %v226
      %v259 = vpack.c.bf16 %v229, %v228
      %v260 = vpack.c.bf16 %v231, %v230
      %v261 = vpack.c.bf16 %v233, %v232
      %v262 = vpack.c.bf16 %v235, %v234
      %v263 = vpack.c.bf16 %v237, %v236
      %v264 = vpack.c.bf16 %v239, %v238
      %v265 = vpack.c.bf16 %v241, %v240
      %v266 = vpack.c.bf16 %v243, %v242
      %v267 = vpack.c.bf16 %v245, %v244
      %v268 = vpack.c.bf16 %v247, %v246
      %v269 = vpack.c.bf16 %v249, %v248
      %v270 = vpack.c.bf16 %v251, %v250
      %v271 = vpack.c.bf16 %v253, %v252
      %v272 = vpack.c.bf16 %v255, %v254
      %v273 = vpack.c.bf16 %v257, %v256
      %v274 = vld [vmem:[%s212] sm:$0x3]
      %v275 = vld [vmem:[%s215] sm:$0x1]
      %v277 = vlaneseq
      %v278 = vshrl.u32 %v277, 7
      %v279 = vsub.s32 0, %v278
      %v280 = vrot.slane %v275, %v279
      %vm282 = vcmask 31744
      %v284 = vsel %vm282, %v258, 0
      %v287 = vsel %vm282, %v259, 0
      %v290 = vsel %vm282, %v260, 0
      %v293 = vsel %vm282, %v261, 0
      %v296 = vsel %vm282, %v262, 0
      %v299 = vsel %vm282, %v263, 0
      %v302 = vsel %vm282, %v264, 0
      %v305 = vsel %vm282, %v265, 0
      %v308 = vsel %vm282, %v266, 0
      %v311 = vsel %vm282, %v267, 0
      %v314 = vsel %vm282, %v268, 0
      %v317 = vsel %vm282, %v269, 0
      %v320 = vsel %vm282, %v270, 0
      %v323 = vsel %vm282, %v271, 0
      %v326 = vsel %vm282, %v272, 0
      %v329 = vsel %vm282, %v273, 0
      %vm331 = vcmask 1041408
      %v333 = vsel %vm331, %v274, 0
      %335 = vmatprep.subr.bf16.mxu0 0
      %336 = vmatpush1.bf16.msra.mxu0 %v333
      %337 = vmatprep.subr.bf16.mxu0 0
      %338 = vmatpush1.bf16.msra.mxu0 0
      %339 = vmatprep.subr.bf16.mxu0 0
      %340 = vmatpush1.bf16.msra.mxu0 0
      %341 = vmatprep.subr.bf16.mxu0 0
      %342 = vmatpush1.bf16.msra.mxu0 0
      %343 = vmatprep.subr.bf16.mxu0 0
      %344 = vmatpush1.bf16.msra.mxu0 0
      %345 = vmatprep.subr.bf16.mxu0 0
      %346 = vmatpush1.bf16.msra.mxu0 0
      %347 = vmatprep.subr.bf16.mxu0 0
      %348 = vmatpush1.bf16.msra.mxu0 0
      %349 = vmatprep.subr.bf16.mxu0 0
      %350 = vmatpush1.bf16.msra.mxu0 0
      %351 = vmatprep.subr.bf16.mxu0 0
      %352 = vmatpush1.bf16.msra.mxu0 0
      %353 = vmatprep.subr.bf16.mxu0 0
      %354 = vmatpush1.bf16.msra.mxu0 0
      %355 = vmatprep.subr.bf16.mxu0 0
      %356 = vmatpush1.bf16.msra.mxu0 0
      %357 = vmatprep.subr.bf16.mxu0 0
      %358 = vmatpush1.bf16.msra.mxu0 0
      %359 = vmatprep.subr.bf16.mxu0 0
      %360 = vmatpush1.bf16.msra.mxu0 0
      %361 = vmatprep.subr.bf16.mxu0 0
      %362 = vmatpush1.bf16.msra.mxu0 0
      %363 = vmatprep.subr.bf16.mxu0 0
      %364 = vmatpush1.bf16.msra.mxu0 0
      %365 = vmatprep.subr.bf16.mxu0 0
      %366 = vmatpush1.bf16.msra.mxu0 0
      %367 = vmatprep.mubr.bf16.mxu0 0
      %368 = vmatmul.mubr.bf16.gmra.mrb[0].mxu0 %v284
      %v369 = vpop.f32.mrb[0].mxu0
      %v370 = vadd.f32 %v280, %v369
      %v371 = vpop.f32.mrb[0].mxu0
      %v372 = vpop.f32.mrb[0].mxu0
      %v373 = vadd.f32 %v280, %v372
      %v374 = vpop.f32.mrb[0].mxu0
      %375 = vmatprep.mubr.bf16.mxu0 0
      %376 = vmatmul.mubr.bf16.gmra.mrb[0].mxu0 %v287
      %v377 = vpop.f32.mrb[0].mxu0
      %v378 = vadd.f32 %v280, %v377
      %v379 = vpop.f32.mrb[0].mxu0
      %v380 = vpop.f32.mrb[0].mxu0
      %v381 = vadd.f32 %v280, %v380
      %v382 = vpop.f32.mrb[0].mxu0
      %383 = vmatprep.mubr.bf16.mxu0 0
      %384 = vmatmul.mubr.bf16.gmra.mrb[0].mxu0 %v290
      %v385 = vpop.f32.mrb[0].mxu0
      %v386 = vadd.f32 %v280, %v385
      %v387 = vpop.f32.mrb[0].mxu0
      %v388 = vpop.f32.mrb[0].mxu0
      %v389 = vadd.f32 %v280, %v388
      %v390 = vpop.f32.mrb[0].mxu0
      %391 = vmatprep.mubr.bf16.mxu0 0
      %392 = vmatmul.mubr.bf16.gmra.mrb[0].mxu0 %v293
      %v393 = vpop.f32.mrb[0].mxu0
      %v394 = vadd.f32 %v280, %v393
      %v395 = vpop.f32.mrb[0].mxu0
      %v396 = vpop.f32.mrb[0].mxu0
      %v397 = vadd.f32 %v280, %v396
      %v398 = vpop.f32.mrb[0].mxu0
      %399 = vmatprep.mubr.bf16.mxu0 0
      %400 = vmatmul.mubr.bf16.gmra.mrb[0].mxu0 %v296
      %v401 = vpop.f32.mrb[0].mxu0
      %v402 = vadd.f32 %v280, %v401
      %v403 = vpop.f32.mrb[0].mxu0
      %v404 = vpop.f32.mrb[0].mxu0
      %v405 = vadd.f32 %v280, %v404
      %v406 = vpop.f32.mrb[0].mxu0
      %407 = vmatprep.mubr.bf16.mxu0 0
      %408 = vmatmul.mubr.bf16.gmra.mrb[0].mxu0 %v299
      %v409 = vpop.f32.mrb[0].mxu0
      %v410 = vadd.f32 %v280, %v409
      %v411 = vpop.f32.mrb[0].mxu0
      %v412 = vpop.f32.mrb[0].mxu0
      %v413 = vadd.f32 %v280, %v412
      %v414 = vpop.f32.mrb[0].mxu0
      %415 = vmatprep.mubr.bf16.mxu0 0
      %416 = vmatmul.mubr.bf16.gmra.mrb[0].mxu0 %v302
      %v417 = vpop.f32.mrb[0].mxu0
      %v418 = vadd.f32 %v280, %v417
      %v419 = vpop.f32.mrb[0].mxu0
      %v420 = vpop.f32.mrb[0].mxu0
      %v421 = vadd.f32 %v280, %v420
      %v422 = vpop.f32.mrb[0].mxu0
      %423 = vmatprep.mubr.bf16.mxu0 0
      %424 = vmatmul.mubr.bf16.gmra.mrb[0].mxu0 %v305
      %v425 = vpop.f32.mrb[0].mxu0
      %v426 = vadd.f32 %v280, %v425
      %v427 = vpop.f32.mrb[0].mxu0
      %v428 = vpop.f32.mrb[0].mxu0
      %v429 = vadd.f32 %v280, %v428
      %v430 = vpop.f32.mrb[0].mxu0
      %431 = vmatprep.mubr.bf16.mxu0 0
      %432 = vmatmul.mubr.bf16.gmra.mrb[0].mxu0 %v308
      %v433 = vpop.f32.mrb[0].mxu0
      %v434 = vadd.f32 %v280, %v433
      %v435 = vpop.f32.mrb[0].mxu0
      %v436 = vpop.f32.mrb[0].mxu0
      %v437 = vadd.f32 %v280, %v436
      %v438 = vpop.f32.mrb[0].mxu0
      %439 = vmatprep.mubr.bf16.mxu0 0
      %440 = vmatmul.mubr.bf16.gmra.mrb[0].mxu0 %v311
      %v441 = vpop.f32.mrb[0].mxu0
      %v442 = vadd.f32 %v280, %v441
      %v443 = vpop.f32.mrb[0].mxu0
      %v444 = vpop.f32.mrb[0].mxu0
      %v445 = vadd.f32 %v280, %v444
      %v446 = vpop.f32.mrb[0].mxu0
      %447 = vmatprep.mubr.bf16.mxu0 0
      %448 = vmatmul.mubr.bf16.gmra.mrb[0].mxu0 %v314
      %v449 = vpop.f32.mrb[0].mxu0
      %v450 = vadd.f32 %v280, %v449
      %v451 = vpop.f32.mrb[0].mxu0
      %v452 = vpop.f32.mrb[0].mxu0
      %v453 = vadd.f32 %v280, %v452
      %v454 = vpop.f32.mrb[0].mxu0
      %455 = vmatprep.mubr.bf16.mxu0 0
      %456 = vmatmul.mubr.bf16.gmra.mrb[0].mxu0 %v317
      %v457 = vpop.f32.mrb[0].mxu0
      %v458 = vadd.f32 %v280, %v457
      %v459 = vpop.f32.mrb[0].mxu0
      %v460 = vpop.f32.mrb[0].mxu0
      %v461 = vadd.f32 %v280, %v460
      %v462 = vpop.f32.mrb[0].mxu0
      %463 = vmatprep.mubr.bf16.mxu0 0
      %464 = vmatmul.mubr.bf16.gmra.mrb[0].mxu0 %v320
      %v465 = vpop.f32.mrb[0].mxu0
      %v466 = vadd.f32 %v280, %v465
      %v467 = vpop.f32.mrb[0].mxu0
      %v468 = vpop.f32.mrb[0].mxu0
      %v469 = vadd.f32 %v280, %v468
      %v470 = vpop.f32.mrb[0].mxu0
      %471 = vmatprep.mubr.bf16.mxu0 0
      %472 = vmatmul.mubr.bf16.gmra.mrb[0].mxu0 %v323
      %v473 = vpop.f32.mrb[0].mxu0
      %v474 = vadd.f32 %v280, %v473
      %v475 = vpop.f32.mrb[0].mxu0
      %v476 = vpop.f32.mrb[0].mxu0
      %v477 = vadd.f32 %v280, %v476
      %v478 = vpop.f32.mrb[0].mxu0
      %479 = vmatprep.mubr.bf16.mxu0 0
      %480 = vmatmul.mubr.bf16.gmra.mrb[0].mxu0 %v326
      %v481 = vpop.f32.mrb[0].mxu0
      %v482 = vadd.f32 %v280, %v481
      %v483 = vpop.f32.mrb[0].mxu0
      %v484 = vpop.f32.mrb[0].mxu0
      %v485 = vadd.f32 %v280, %v484
      %v486 = vpop.f32.mrb[0].mxu0
      %487 = vmatprep.mubr.bf16.mxu0 0
      %488 = vmatmul.mubr.bf16.gmra.mrb[0].mxu0 %v329
      %v489 = vpop.f32.mrb[0].mxu0
      %v490 = vadd.f32 %v280, %v489
      %v491 = vpop.f32.mrb[0].mxu0
      %v492 = vpop.f32.mrb[0].mxu0
      %v493 = vadd.f32 %v280, %v492
      %v494 = vpop.f32.mrb[0].mxu0
      %495 = vdwg.mxu0
      %v496 = vmax.f32 %v370, 0.0
      %v497 = vmax.f32 %v373, 0.0
      %v498 = vmax.f32 %v378, 0.0
      %v499 = vmax.f32 %v381, 0.0
      %v500 = vmax.f32 %v386, 0.0
      %v501 = vmax.f32 %v389, 0.0
      %v502 = vmax.f32 %v394, 0.0
      %v503 = vmax.f32 %v397, 0.0
      %v504 = vmax.f32 %v402, 0.0
      %v505 = vmax.f32 %v405, 0.0
      %v506 = vmax.f32 %v410, 0.0
      %v507 = vmax.f32 %v413, 0.0
      %v508 = vmax.f32 %v418, 0.0
      %v509 = vmax.f32 %v421, 0.0
      %v510 = vmax.f32 %v426, 0.0
      %v511 = vmax.f32 %v429, 0.0
      %v512 = vmax.f32 %v434, 0.0
      %v513 = vmax.f32 %v437, 0.0
      %v514 = vmax.f32 %v442, 0.0
      %v515 = vmax.f32 %v445, 0.0
      %v516 = vmax.f32 %v450, 0.0
      %v517 = vmax.f32 %v453, 0.0
      %v518 = vmax.f32 %v458, 0.0
      %v519 = vmax.f32 %v461, 0.0
      %v520 = vmax.f32 %v466, 0.0
      %v521 = vmax.f32 %v469, 0.0
      %v522 = vmax.f32 %v474, 0.0
      %v523 = vmax.f32 %v477, 0.0
      %v524 = vmax.f32 %v482, 0.0
      %v525 = vmax.f32 %v485, 0.0
      %v526 = vmax.f32 %v490, 0.0
      %v527 = vmax.f32 %v493, 0.0
      %v528 = vpack.c.bf16 %v497, %v496
      %v529 = vpack.c.bf16 %v499, %v498
      %v530 = vpack.c.bf16 %v501, %v500
      %v531 = vpack.c.bf16 %v503, %v502
      %v532 = vpack.c.bf16 %v505, %v504
      %v533 = vpack.c.bf16 %v507, %v506
      %v534 = vpack.c.bf16 %v509, %v508
      %v535 = vpack.c.bf16 %v511, %v510
      %v536 = vpack.c.bf16 %v513, %v512
      %v537 = vpack.c.bf16 %v515, %v514
      %v538 = vpack.c.bf16 %v517, %v516
      %v539 = vpack.c.bf16 %v519, %v518
      %v540 = vpack.c.bf16 %v521, %v520
      %v541 = vpack.c.bf16 %v523, %v522
      %v542 = vpack.c.bf16 %v525, %v524
      %v543 = vpack.c.bf16 %v527, %v526
      %v560 = vunpack.c.l.b16 %v528
      %v561 = vunpack.c.h.b16 %v528
      %v562 = vunpack.c.l.b16 %v529
      %v563 = vunpack.c.h.b16 %v529
      %v564 = vunpack.c.l.b16 %v530
      %v565 = vunpack.c.h.b16 %v530
      %v566 = vunpack.c.l.b16 %v531
      %v567 = vunpack.c.h.b16 %v531
      %v568 = vunpack.c.l.b16 %v532
      %v569 = vunpack.c.h.b16 %v532
      %v570 = vunpack.c.l.b16 %v533
      %v571 = vunpack.c.h.b16 %v533
      %v572 = vunpack.c.l.b16 %v534
      %v573 = vunpack.c.h.b16 %v534
      %v574 = vunpack.c.l.b16 %v535
      %v575 = vunpack.c.h.b16 %v535
      %v576 = vunpack.c.l.b16 %v536
      %v577 = vunpack.c.h.b16 %v536
      %v578 = vunpack.c.l.b16 %v537
      %v579 = vunpack.c.h.b16 %v537
      %v580 = vunpack.c.l.b16 %v538
      %v581 = vunpack.c.h.b16 %v538
      %v582 = vunpack.c.l.b16 %v539
      %v583 = vunpack.c.h.b16 %v539
      %v584 = vunpack.c.l.b16 %v540
      %v585 = vunpack.c.h.b16 %v540
      %v586 = vunpack.c.l.b16 %v541
      %v587 = vunpack.c.h.b16 %v541
      %v588 = vunpack.c.l.b16 %v542
      %v589 = vunpack.c.h.b16 %v542
      %v590 = vunpack.c.l.b16 %v543
      %v591 = vunpack.c.h.b16 %v543
      %v592 = vpack.c.b16 %v560, %v560
      %v593 = vpack.c.b16 %v561, %v561
      %v594 = vpack.c.b16 %v562, %v562
      %v595 = vpack.c.b16 %v563, %v563
      %v596 = vpack.c.b16 %v564, %v564
      %v597 = vpack.c.b16 %v565, %v565
      %v598 = vpack.c.b16 %v566, %v566
      %v599 = vpack.c.b16 %v567, %v567
      %v600 = vpack.c.b16 %v568, %v568
      %v601 = vpack.c.b16 %v569, %v569
      %v602 = vpack.c.b16 %v570, %v570
      %v603 = vpack.c.b16 %v571, %v571
      %v604 = vpack.c.b16 %v572, %v572
      %v605 = vpack.c.b16 %v573, %v573
      %v606 = vpack.c.b16 %v574, %v574
      %v607 = vpack.c.b16 %v575, %v575
      %v608 = vpack.c.b16 %v576, %v576
      %v609 = vpack.c.b16 %v577, %v577
      %v610 = vpack.c.b16 %v578, %v578
      %v611 = vpack.c.b16 %v579, %v579
      %v612 = vpack.c.b16 %v580, %v580
      %v613 = vpack.c.b16 %v581, %v581
      %v614 = vpack.c.b16 %v582, %v582
      %v615 = vpack.c.b16 %v583, %v583
      %v616 = vpack.c.b16 %v584, %v584
      %v617 = vpack.c.b16 %v585, %v585
      %v618 = vpack.c.b16 %v586, %v586
      %v619 = vpack.c.b16 %v587, %v587
      %v620 = vpack.c.b16 %v588, %v588
      %v621 = vpack.c.b16 %v589, %v589
      %v622 = vpack.c.b16 %v590, %v590
      %v623 = vpack.c.b16 %v591, %v591
      %656 = vst [vmem:[%s223] sm:$0xf] %v592
      %657 = vst [vmem:[%s223 + $0x4] sm:$0xf] %v593
      %658 = vst [vmem:[%s223 + $0x8] sm:$0xf] %v594
      %659 = vst [vmem:[%s223 + $0xc] sm:$0xf] %v595
      %660 = vst [vmem:[%s223 + $0x10] sm:$0xf] %v596
      %661 = vst [vmem:[%s223 + $0x14] sm:$0xf] %v597
      %662 = vst [vmem:[%s223 + $0x18] sm:$0xf] %v598
      %663 = vst [vmem:[%s223 + $0x1c] sm:$0xf] %v599
      %664 = vst [vmem:[%s223 + $0x20] sm:$0xf] %v600
      %665 = vst [vmem:[%s223 + $0x24] sm:$0xf] %v601
      %666 = vst [vmem:[%s223 + $0x28] sm:$0xf] %v602
      %667 = vst [vmem:[%s223 + $0x2c] sm:$0xf] %v603
      %668 = vst [vmem:[%s223 + $0x30] sm:$0xf] %v604
      %669 = vst [vmem:[%s223 + $0x34] sm:$0xf] %v605
      %670 = vst [vmem:[%s223 + $0x38] sm:$0xf] %v606
      %671 = vst [vmem:[%s223 + $0x3c] sm:$0xf] %v607
      %672 = vst [vmem:[%s223 + $0x40] sm:$0xf] %v608
      %673 = vst [vmem:[%s223 + $0x44] sm:$0xf] %v609
      %674 = vst [vmem:[%s223 + $0x48] sm:$0xf] %v610
      %675 = vst [vmem:[%s223 + $0x4c] sm:$0xf] %v611
      %676 = vst [vmem:[%s223 + $0x50] sm:$0xf] %v612
      %677 = vst [vmem:[%s223 + $0x54] sm:$0xf] %v613
      %678 = vst [vmem:[%s223 + $0x58] sm:$0xf] %v614
      %679 = vst [vmem:[%s223 + $0x5c] sm:$0xf] %v615
      %680 = vst [vmem:[%s223 + $0x60] sm:$0xf] %v616
      %681 = vst [vmem:[%s223 + $0x64] sm:$0xf] %v617
      %682 = vst [vmem:[%s223 + $0x68] sm:$0xf] %v618
      %683 = vst [vmem:[%s223 + $0x6c] sm:$0xf] %v619
      %684 = vst [vmem:[%s223 + $0x70] sm:$0xf] %v620
      %685 = vst [vmem:[%s223 + $0x74] sm:$0xf] %v621
      %686 = vst [vmem:[%s223 + $0x78] sm:$0xf] %v622
      %687 = vst [vmem:[%s223 + $0x7c] sm:$0xf] %v623
      %s688 = smul.u32 32, %s18
      %p689 = scmp.lt.s32.totalorder %s688, 63
      %s690 = scalar_select %p689, %s688, 63
      %p691 = scmp.lt.s32.totalorder %s19, 0
      %s692 = scalar_select %p691, %s19, 0
      %s693 = sadd.s32 %s692, %s690
      %s694 = smul.addr %s693, 4
      %s695 = scalar_lea.vmem %s3, %s694
      // Predicated region
      $region33: #{bottleneck_forward.3} parent=31 // pred_check
        %p696 = pneg %p124
      $region34: #{bottleneck_forward.3} parent=31 // pred_check_branch
        %698 = sbr.rel (%p696) target = $region36
      $region35: #{bottleneck_forward.3} parent=31 // pred_region
        %s699 = smul.u32 32, %s18
      $region36: #{bottleneck_forward.3} parent=31 // pred_fallthru
        _
    $region32: #{bottleneck_forward.3} parent=5 // pred_fallthru
      _
    %p700 = scmp.le.s32.totalorder 2, %s9
    // Predicated region
    $region37: #{bottleneck_forward.3} parent=5 // pred_check
      %p701 = pneg %p700
    $region38: #{bottleneck_forward.3} parent=5 // pred_check_branch
      %703 = sbr.rel (%p701) target = $region40
    $region39: #{bottleneck_forward.3} parent=5 // pred_region
      %s704 = ssub.s32 %s9, 2
      // Predicated region
      $region41: #{bottleneck_forward.3} parent=39 // pred_check
        %p705 = pneg %p130
      $region42: #{bottleneck_forward.3} parent=39 // pred_check_branch
        %707 = sbr.rel (%p705) target = $region44
      $region43: #{bottleneck_forward.3} parent=39 // pred_region
        %s708 = smul.u32 32, %s20
        %p709 = scmp.lt.s32.totalorder %s708, 63
        %s710 = scalar_select %p709, %s708, 63
        %p711 = scmp.lt.s32.totalorder %s21, 0
        %s712 = scalar_select %p711, %s21, 0
        %s713 = sadd.s32 %s712, %s710
        %s714 = smul.addr %s713, 4
        %s715 = scalar_lea.vmem %s3, %s714
      $region44: #{bottleneck_forward.3} parent=39 // pred_fallthru
        _
    $region40: #{bottleneck_forward.3} parent=5 // pred_fallthru
      _
  $region6: #{bottleneck_forward.3} parent=0 // loop_footer
    %s13 = sadd.s32 1, %s9
  $region7: #{bottleneck_forward.3} parent=0 // loop_footer_branch
    %8 = sbr.rel target = $region3
  $region8: #{bottleneck_forward.3} parent=0 // loop_exit
    _

// kernel: bottleneck_forward.4
$region0: #{bottleneck_forward.4}
  #allocation0 [shape = 'u32[]', space=smem, size = 0x4, offset = 0x4, fixed_abs, tag = 'smem constant byte address 0x4 - core index']
  #allocation1 [shape = 'u32[144,128]{1,0:T(1,128)}', space=vmem, size = 0x12000, scoped, tag = 'internal scratch']
  #allocation2 [shape = 'f32[16,128]{1,0:T(8,128)}', space=vmem, size = 0x2000, scoped, tag = 'scratch operand']
  %s0 = inlined_call_operand.vmem [shape: bf16[18,2,18,128], index: 0, kind: input, shape index: {}]
  %s1 = inlined_call_operand.vmem [shape: bf16[3,3,128,128], index: 1, kind: input, shape index: {}]
  %s2 = inlined_call_operand.vmem [shape: f32[1,128], index: 2, kind: input, shape index: {}]
  %s3 = inlined_call_operand.vmem [shape: bf16[8,2,8,128], index: 3, kind: output, shape index: {}]
  %s4 = sld [smem:[#allocation0]]
  $region53: #{bottleneck_forward.4} parent=0
    _
  %s6 = ssub.s32 1, %s4
  %s7 = scalar_select 0, %s6, %s4
  loop: start=0, step=1, limit=26
  $region2: #{bottleneck_forward.4} parent=0 // loop_pre_header
    _
  $region3: #{bottleneck_forward.4} parent=0 // loop_header
    %s9 = sphi 0, %s13
    %p10 = scmp.ge.s32.totalorder %s9, 26
    %s16 = sphi 0, %s35
    %s17 = sphi 0, %s31
    %s18 = sphi 0, %s27
    %s19 = sphi 0, %s16
    %s20 = sphi 0, %s17
    %s21 = sphi 0, %s18
    %s22 = sphi 0, %s19
    %s23 = sphi 0, %s20
    %s24 = sphi 0, %s21
    %s42 = sphi 0, %s44
    %s45 = sphi 0, %s42
    %s46 = sphi 0, %s45
    %s62 = sphi 0, %s46
    %s70 = sphi 0, %s72
    %s73 = sphi 0, %s70
    %s74 = sphi 0, %s73
    %s90 = sphi 0, %s74
    %s96 = sphi 0, %s98
    %s99 = sphi 0, %s96
    %s100 = sphi 0, %s99
    %s116 = sphi 0, %s100
    %s124 = sphi 0, %s126
    %s127 = sphi 0, %s124
    %s128 = sphi 0, %s127
    %s144 = sphi 0, %s128
  $region4: #{bottleneck_forward.4} parent=0 // loop_header_branch
    %12 = sbr.rel (%p10) target = $region8
  $region5: #{bottleneck_forward.4} parent=0 // loop_body
    %s14 = ssub.s32 %s9, 1
    %s15 = ssub.s32 %s9, 2
    %s25 = sadd.s32 1, %s18
    %p26 = scmp.ge.s32.totalorder %s25, 3
    %s27 = scalar_select %p26, 0, %s25
    %s28 = sadd.s32 1, %s17
    %s29 = scalar_select %p26, %s28, %s17
    %p30 = scmp.ge.s32.totalorder %s29, 1
    %s31 = scalar_select %p30, 0, %s29
    %s32 = sadd.s32 1, %s16
    %s33 = scalar_select %p30, %s32, %s16
    %p34 = scmp.ge.s32.totalorder %s33, 8
    %s35 = scalar_select %p34, 0, %s33
    %s36 = smul.u32 %s16, 2
    %s37 = sadd.s32 %s36, %s18
    %s38 = smul.u32 %s35, 2
    %s39 = sadd.s32 %s38, %s27
    %s40 = ssub.s32 %s37, %s39
    %p41 = scmp.eq.s32.totalorder %s40, 0
    %s43 = sadd.s32 %s42, 1
    %s44 = scalar_select %p41, %s42, %s43
    %p47 = pneg %p41
    %p48 = scmp.eq.s32.totalorder %s9, 23
    %p49 = por %p47, %p48
    %p50 = scmp.ne.s32.totalorder %s42, %s45
    %p51 = scmp.eq.s32.totalorder %s9, 0
    %p52 = por %p50, %p51
    %p53 = scmp.ne.s32.totalorder %s42, %s45
    %p54 = scmp.eq.s32.totalorder %s14, 23
    %p55 = por %p53, %p54
    %p56 = scmp.ne.s32.totalorder %s45, %s46
    %p57 = scmp.eq.s32.totalorder %s14, 0
    %p58 = por %p56, %p57
    %p59 = scmp.ne.s32.totalorder %s45, %s46
    %p60 = scmp.eq.s32.totalorder %s15, 23
    %p61 = por %p59, %p60
    %p63 = scmp.ne.s32.totalorder %s46, %s62
    %p64 = scmp.eq.s32.totalorder %s15, 0
    %p65 = por %p63, %p64
    %s66 = ssub.s32 %s18, %s27
    %s67 = ssub.s32 %s17, %s31
    %s68 = sor.u32 %s66, %s67
    %p69 = scmp.eq.s32.totalorder %s68, 0
    %s71 = sadd.s32 %s70, 1
    %s72 = scalar_select %p69, %s70, %s71
    %p75 = pneg %p69
    %p76 = scmp.eq.s32.totalorder %s9, 23
    %p77 = por %p75, %p76
    %p78 = scmp.ne.s32.totalorder %s70, %s73
    %p79 = scmp.eq.s32.totalorder %s9, 0
    %p80 = por %p78, %p79
    %p81 = scmp.ne.s32.totalorder %s70, %s73
    %p82 = scmp.eq.s32.totalorder %s14, 23
    %p83 = por %p81, %p82
    %p84 = scmp.ne.s32.totalorder %s73, %s74
    %p85 = scmp.eq.s32.totalorder %s14, 0
    %p86 = por %p84, %p85
    %p87 = scmp.ne.s32.totalorder %s73, %s74
    %p88 = scmp.eq.s32.totalorder %s15, 23
    %p89 = por %p87, %p88
    %p91 = scmp.ne.s32.totalorder %s74, %s90
    %p92 = scmp.eq.s32.totalorder %s15, 0
    %p93 = por %p91, %p92
    %s94 = ssub.s32 %s17, %s31
    %p95 = scmp.eq.s32.totalorder %s94, 0
    %s97 = sadd.s32 %s96, 1
    %s98 = scalar_select %p95, %s96, %s97
    %p101 = pneg %p95
    %p102 = scmp.eq.s32.totalorder %s9, 23
    %p103 = por %p101, %p102
    %p104 = scmp.ne.s32.totalorder %s96, %s99
    %p105 = scmp.eq.s32.totalorder %s9, 0
    %p106 = por %p104, %p105
    %p107 = scmp.ne.s32.totalorder %s96, %s99
    %p108 = scmp.eq.s32.totalorder %s14, 23
    %p109 = por %p107, %p108
    %p110 = scmp.ne.s32.totalorder %s99, %s100
    %p111 = scmp.eq.s32.totalorder %s14, 0
    %p112 = por %p110, %p111
    %p113 = scmp.ne.s32.totalorder %s99, %s100
    %p114 = scmp.eq.s32.totalorder %s15, 23
    %p115 = por %p113, %p114
    %p117 = scmp.ne.s32.totalorder %s100, %s116
    %p118 = scmp.eq.s32.totalorder %s15, 0
    %p119 = por %p117, %p118
    %s120 = ssub.s32 %s16, %s35
    %s121 = ssub.s32 %s17, %s31
    %s122 = sor.u32 %s120, %s121
    %p123 = scmp.eq.s32.totalorder %s122, 0
    %s125 = sadd.s32 %s124, 1
    %s126 = scalar_select %p123, %s124, %s125
    %p129 = pneg %p123
    %p130 = scmp.eq.s32.totalorder %s9, 23
    %p131 = por %p129, %p130
    %p132 = scmp.ne.s32.totalorder %s124, %s127
    %p133 = scmp.eq.s32.totalorder %s9, 0
    %p134 = por %p132, %p133
    %p135 = scmp.ne.s32.totalorder %s124, %s127
    %p136 = scmp.eq.s32.totalorder %s14, 23
    %p137 = por %p135, %p136
    %p138 = scmp.ne.s32.totalorder %s127, %s128
    %p139 = scmp.eq.s32.totalorder %s14, 0
    %p140 = por %p138, %p139
    %p141 = scmp.ne.s32.totalorder %s127, %s128
    %p142 = scmp.eq.s32.totalorder %s15, 23
    %p143 = por %p141, %p142
    %p145 = scmp.ne.s32.totalorder %s128, %s144
    %p146 = scmp.eq.s32.totalorder %s15, 0
    %p147 = por %p145, %p146
    %p148 = scmp.le.s32.totalorder 1, %s9
    %p149 = scmp.lt.s32.totalorder %s9, 25
    %p150 = pnand %p148, %p149
    %p151 = pneg %p150
    // Predicated region
    $region9: #{bottleneck_forward.4} parent=5 // pred_check
      _
    $region10: #{bottleneck_forward.4} parent=5 // pred_check_branch
      %153 = sbr.rel (%p150) target = $region12
    $region11: #{bottleneck_forward.4} parent=5 // pred_region
      %s154 = ssub.s32 %s9, 1
      // Predicated region
      $region13: #{bottleneck_forward.4} parent=11 // pred_check
        %p155 = pneg %p112
      $region14: #{bottleneck_forward.4} parent=11 // pred_check_branch
        %157 = sbr.rel (%p155) target = $region16
      $region15: #{bottleneck_forward.4} parent=11 // pred_region
        %p158 = scmp.lt.s32.totalorder %s20, 0
        %s159 = scalar_select %p158, %s20, 0
        %s160 = scalar_lea.vmem %s2, %s159
      $region16: #{bottleneck_forward.4} parent=11 // pred_fallthru
        _
    $region12: #{bottleneck_forward.4} parent=5 // pred_fallthru
      _
    %p161 = scmp.lt.s32.totalorder %s9, 24
    // Predicated region
    $region17: #{bottleneck_forward.4} parent=5 // pred_check
      %p162 = pneg %p161
    $region18: #{bottleneck_forward.4} parent=5 // pred_check_branch
      %164 = sbr.rel (%p162) target = $region20
    $region19: #{bottleneck_forward.4} parent=5 // pred_region
      // Predicated region
      $region21: #{bottleneck_forward.4} parent=19 // pred_check
        %p165 = pneg %p52
      $region22: #{bottleneck_forward.4} parent=19 // pred_check_branch
        %167 = sbr.rel (%p165) target = $region24
      $region23: #{bottleneck_forward.4} parent=19 // pred_region
        %s168 = smul.u32 %s16, 2
        %s169 = sadd.s32 %s168, %s18
        %p170 = scmp.lt.s32.totalorder %s169, 17
        %s171 = scalar_select %p170, %s169, 17
        %s172 = smul.addr %s171, 6
        %s173 = smul.addr %s172, 4
        %s174 = scalar_lea.vmem %s0, %s173
        %s175 = smul.u32 %s16, 2
        %s176 = sadd.s32 %s175, %s18
      $region24: #{bottleneck_forward.4} parent=19 // pred_fallthru
        _
      // Predicated region
      $region25: #{bottleneck_forward.4} parent=19 // pred_check
        %p177 = pneg %p80
      $region26: #{bottleneck_forward.4} parent=19 // pred_check_branch
        %179 = sbr.rel (%p177) target = $region28
      $region27: #{bottleneck_forward.4} parent=19 // pred_region
        %p180 = scmp.lt.s32.totalorder %s18, 2
        %s181 = scalar_select %p180, %s18, 2
        %p182 = scmp.lt.s32.totalorder %s17, 0
        %s183 = scalar_select %p182, %s17, 0
        %s184 = smul.addr %s181, 48
        %s185 = sadd.s32 %s183, %s184
        %s186 = smul.addr %s185, 4
        %s187 = scalar_lea.vmem %s1, %s186
      $region28: #{bottleneck_forward.4} parent=19 // pred_fallthru
        _
    $region20: #{bottleneck_forward.4} parent=5 // pred_fallthru
      _
    %p188 = scmp.le.s32.totalorder 1, %s9
    %p189 = scmp.lt.s32.totalorder %s9, 25
    %p190 = pnand %p188, %p189
    %p191 = pneg %p190
    // Predicated region
    $region29: #{bottleneck_forward.4} parent=5 // pred_check
      _
    $region30: #{bottleneck_forward.4} parent=5 // pred_check_branch
      %193 = sbr.rel (%p190) target = $region32
    $region31: #{bottleneck_forward.4} parent=5 // pred_region
      %s194 = ssub.s32 %s9, 1
      %s195 = smul.u32 %s19, 2
      %s196 = sadd.s32 %s195, %s21
      %p197 = scmp.lt.s32.totalorder %s196, 17
      %s198 = scalar_select %p197, %s196, 17
      %s199 = smul.addr %s198, 6
      %s200 = smul.addr %s199, 4
      %s201 = scalar_lea.vmem %s0, %s200
      %p202 = pneg %p58
      %p203 = pneg %p55
      %p204 = scmp.lt.s32.totalorder %s21, 2
      %s205 = scalar_select %p204, %s21, 2
      %p206 = scmp.lt.s32.totalorder %s20, 0
      %s207 = scalar_select %p206, %s20, 0
      %s208 = smul.addr %s205, 48
      %s209 = sadd.s32 %s207, %s208
      %s210 = smul.addr %s209, 4
      %s211 = scalar_lea.vmem %s1, %s210
      %p212 = pneg %p86
      %p213 = pneg %p83
      %p214 = scmp.lt.s32.totalorder %s20, 0
      %s215 = scalar_select %p214, %s20, 0
      %s216 = scalar_lea.vmem %s2, %s215
      %p217 = pneg %p112
      %p218 = pneg %p109
      %p219 = pneg %p140
      %p220 = pneg %p137
      %p221 = scmp.lt.s32.totalorder %s19, 7
      %s222 = scalar_select %p221, %s19, 7
      %p223 = scmp.lt.s32.totalorder %s20, 0
      %s224 = scalar_select %p223, %s20, 0
      %s225 = smul.addr %s222, 2
      %s226 = sadd.s32 %s224, %s225
      %s227 = smul.addr %s226, 4
      %s228 = scalar_lea.vmem %s3, %s227
      %s229 = smul.u32 %s19, 2
      %s230 = sadd.s32 %s229, %s21
      %p231 = scmp.lt.s32.totalorder %s230, 17
      %s232 = scalar_select %p231, %s230, 17
      %s233 = smul.addr %s232, 6
      %s234 = smul.addr %s233, 4
      %s235 = scalar_lea.vmem %s0, %s234
      %s236 = smul.u32 %s19, 2
      %s237 = sadd.s32 %s236, %s21
      %p238 = scmp.lt.s32.totalorder %s21, 2
      %s239 = scalar_select %p238, %s21, 2
      %p240 = scmp.lt.s32.totalorder %s20, 0
      %s241 = scalar_select %p240, %s20, 0
      %s242 = smul.addr %s239, 48
      %s243 = sadd.s32 %s241, %s242
      %s244 = smul.addr %s243, 4
      %s245 = scalar_lea.vmem %s1, %s244
      %p246 = scmp.lt.s32.totalorder %s20, 0
      %s247 = scalar_select %p246, %s20, 0
      %s248 = scalar_lea.vmem %s2, %s247
      %p249 = scmp.lt.s32.totalorder %s19, 7
      %s250 = scalar_select %p249, %s19, 7
      %p251 = scmp.lt.s32.totalorder %s20, 0
      %s252 = scalar_select %p251, %s20, 0
      %s253 = smul.addr %s250, 2
      %s254 = sadd.s32 %s252, %s253
      %s255 = smul.addr %s254, 4
      %s256 = scalar_lea.vmem %s3, %s255
      %p258 = scmp.eq.s32.totalorder %s21, 0
      // Predicated region
      $region33: #{bottleneck_forward.4} parent=31 // pred_check
        %p259 = pneg %p258
      $region34: #{bottleneck_forward.4} parent=31 // pred_check_branch
        %261 = sbr.rel (%p259) target = $region36
      $region35: #{bottleneck_forward.4} parent=31 // pred_region
        %262 = vst [vmem:[#allocation2] sm:$0xff] 0.0
        %263 = vst [vmem:[#allocation2 + $0x8] sm:$0xff] 0.0
      $region36: #{bottleneck_forward.4} parent=31 // pred_fallthru
        _
      %v264 = vld [vmem:[%s235] sm:$0xf]
      %v265 = vld [vmem:[%s235 + $0x4] sm:$0xf]
      %v266 = vld [vmem:[%s235 + $0x8] sm:$0x1]
      %v267 = vld [vmem:[%s235 + $0xc] sm:$0xf]
      %v268 = vld [vmem:[%s235 + $0x10] sm:$0xf]
      %v269 = vld [vmem:[%s235 + $0x14] sm:$0x1]
      %v270 = vld [vmem:[#allocation2] sm:$0xff]
      %v271 = vld [vmem:[#allocation2 + $0x8] sm:$0xff]
      %v272 = vld [vmem:[%s245] sm:$0xf]
      %v273 = vld [vmem:[%s245 + $0x4] sm:$0xf]
      %v274 = vld [vmem:[%s245 + $0x8] sm:$0xf]
      %v275 = vld [vmem:[%s245 + $0xc] sm:$0xf]
      %v276 = vld [vmem:[%s245 + $0x10] sm:$0xf]
      %v277 = vld [vmem:[%s245 + $0x14] sm:$0xf]
      %v278 = vld [vmem:[%s245 + $0x18] sm:$0xf]
      %v279 = vld [vmem:[%s245 + $0x1c] sm:$0xf]
      %v280 = vld [vmem:[%s245 + $0x20] sm:$0xf]
      %v281 = vld [vmem:[%s245 + $0x24] sm:$0xf]
      %v282 = vld [vmem:[%s245 + $0x28] sm:$0xf]
      %v283 = vld [vmem:[%s245 + $0x2c] sm:$0xf]
      %v284 = vld [vmem:[%s245 + $0x30] sm:$0xf]
      %v285 = vld [vmem:[%s245 + $0x34] sm:$0xf]
      %v286 = vld [vmem:[%s245 + $0x38] sm:$0xf]
      %v287 = vld [vmem:[%s245 + $0x3c] sm:$0xf]
      %v290 = vunpack.c.l.b16 %v264
      %v291 = vunpack.c.l.b16 %v267
      %v292 = vpack.c.b16 %v291, %v290
      %v310 = vunpack.c.l.b16 %v272
      %v311 = vunpack.c.l.b16 %v273
      %v312 = vunpack.c.l.b16 %v274
      %v313 = vunpack.c.l.b16 %v275
      %v314 = vunpack.c.l.b16 %v276
      %v315 = vunpack.c.l.b16 %v277
      %v316 = vunpack.c.l.b16 %v278
      %v317 = vunpack.c.l.b16 %v279
      %v318 = vunpack.c.l.b16 %v280
      %v319 = vunpack.c.l.b16 %v281
      %v320 = vunpack.c.l.b16 %v282
      %v321 = vunpack.c.l.b16 %v283
      %v322 = vunpack.c.l.b16 %v284
      %v323 = vunpack.c.l.b16 %v285
      %v324 = vunpack.c.l.b16 %v286
      %v325 = vunpack.c.l.b16 %v287
      %v326 = vpack.c.b16 %v311, %v310
      %v327 = vpack.c.b16 %v313, %v312
      %v328 = vpack.c.b16 %v315, %v314
      %v329 = vpack.c.b16 %v317, %v316
      %v330 = vpack.c.b16 %v319, %v318
      %v331 = vpack.c.b16 %v321, %v320
      %v332 = vpack.c.b16 %v323, %v322
      %v333 = vpack.c.b16 %v325, %v324
      %342 = vmatprep.subr.bf16.mxu0 0
      %343 = vmatpush1.bf16.msra.mxu0 %v326
      %344 = vmatprep.subr.bf16.mxu0 0
      %345 = vmatpush1.bf16.msra.mxu0 %v327
      %346 = vmatprep.subr.bf16.mxu0 0
      %347 = vmatpush1.bf16.msra.mxu0 %v328
      %348 = vmatprep.subr.bf16.mxu0 0
      %349 = vmatpush1.bf16.msra.mxu0 %v329
      %350 = vmatprep.subr.bf16.mxu0 0
      %351 = vmatpush1.bf16.msra.mxu0 %v330
      %352 = vmatprep.subr.bf16.mxu0 0
      %353 = vmatpush1.bf16.msra.mxu0 %v331
      %354 = vmatprep.subr.bf16.mxu0 0
      %355 = vmatpush1.bf16.msra.mxu0 %v332
      %356 = vmatprep.subr.bf16.mxu0 0
      %357 = vmatpush1.bf16.msra.mxu0 %v333
      %358 = vmatprep.subr.bf16.mxu0 0
      %359 = vmatpush1.bf16.msra.mxu0 0
      %360 = vmatprep.subr.bf16.mxu0 0
      %361 = vmatpush1.bf16.msra.mxu0 0
      %362 = vmatprep.subr.bf16.mxu0 0
      %363 = vmatpush1.bf16.msra.mxu0 0
      %364 = vmatprep.subr.bf16.mxu0 0
      %365 = vmatpush1.bf16.msra.mxu0 0
      %366 = vmatprep.subr.bf16.mxu0 0
      %367 = vmatpush1.bf16.msra.mxu0 0
      %368 = vmatprep.subr.bf16.mxu0 0
      %369 = vmatpush1.bf16.msra.mxu0 0
      %370 = vmatprep.subr.bf16.mxu0 0
      %371 = vmatpush1.bf16.msra.mxu0 0
      %372 = vmatprep.subr.bf16.mxu0 0
      %373 = vmatpush1.bf16.msra.mxu0 0
      %374 = vmatprep.mubr.bf16.mxu0 0
      %375 = vmatmul.mubr.bf16.gmra.mrb[0].mxu0 %v292
      %v376 = vpop.f32.mrb[0].mxu0
      %v377 = vadd.f32 0.0, %v376
      %v378 = vpop.f32.mrb[0].mxu0
      %v379 = vpop.f32.mrb[0].mxu0
      %v380 = vadd.f32 0.0, %v379
      %v381 = vpop.f32.mrb[0].mxu0
      %382 = vdwg.mxu0
      %v383 = vadd.f32 %v270, %v377
      %v384 = vadd.f32 %v271, %v380
      %385 = vst [vmem:[#allocation2] sm:$0xff] %v383
      %386 = vst [vmem:[#allocation2 + $0x8] sm:$0xff] %v384
      %vm387 = vsmask.f32 3328
      %vm388 = vsmask.f32 7440
      %vm389 = vmor %vm387, %vm388
      %v391 = vshrl.u32 %v265, 16
      %v393 = vrot.slane %v391, 4
      %v394 = vshll.u32 %v265, 16
      %v396 = vrot.slane %v394, 5
      %v397 = vor.u32 %v393, %v396
      %v398 = vrot.slane %v397, 4
      %v400 = vshll.u32 %v266, 16
      %v402 = vrot.slane %v400, 5
      %v403 = vsel %vm389, %v398, %v402
      %v405 = vshrl.u32 %v268, 16
      %v407 = vrot.slane %v405, 4
      %v408 = vshll.u32 %v268, 16
      %v410 = vrot.slane %v408, 5
      %v411 = vor.u32 %v407, %v410
      %v412 = vrot.slane %v411, 4
      %v414 = vshll.u32 %v269, 16
      %v416 = vrot.slane %v414, 5
      %v417 = vsel %vm389, %v412, %v416
      %v418 = vld [vmem:[#allocation2] sm:$0xff]
      %v419 = vld [vmem:[#allocation2 + $0x8] sm:$0xff]
      %s420 = scalar_lea.vmem %s245, 64
      %v421 = vld [vmem:[%s420] sm:$0xf]
      %v422 = vld [vmem:[%s420 + $0x4] sm:$0xf]
      %v423 = vld [vmem:[%s420 + $0x8] sm:$0xf]
      %v424 = vld [vmem:[%s420 + $0xc] sm:$0xf]
      %v425 = vld [vmem:[%s420 + $0x10] sm:$0xf]
      %v426 = vld [vmem:[%s420 + $0x14] sm:$0xf]
      %v427 = vld [vmem:[%s420 + $0x18] sm:$0xf]
      %v428 = vld [vmem:[%s420 + $0x1c] sm:$0xf]
      %v429 = vld [vmem:[%s420 + $0x20] sm:$0xf]
      %v430 = vld [vmem:[%s420 + $0x24] sm:$0xf]
      %v431 = vld [vmem:[%s420 + $0x28] sm:$0xf]
      %v432 = vld [vmem:[%s420 + $0x2c] sm:$0xf]
      %v433 = vld [vmem:[%s420 + $0x30] sm:$0xf]
      %v434 = vld [vmem:[%s420 + $0x34] sm:$0xf]
      %v435 = vld [vmem:[%s420 + $0x38] sm:$0xf]
      %v436 = vld [vmem:[%s420 + $0x3c] sm:$0xf]
      %v437 = vunpack.c.l.b16 %v403
      %v438 = vunpack.c.l.b16 %v417
      %v439 = vpack.c.b16 %v438, %v437
      %v457 = vunpack.c.l.b16 %v421
      %v458 = vunpack.c.l.b16 %v422
      %v459 = vunpack.c.l.b16 %v423
      %v460 = vunpack.c.l.b16 %v424
      %v461 = vunpack.c.l.b16 %v425
      %v462 = vunpack.c.l.b16 %v426
      %v463 = vunpack.c.l.b16 %v427
      %v464 = vunpack.c.l.b16 %v428
      %v465 = vunpack.c.l.b16 %v429
      %v466 = vunpack.c.l.b16 %v430
      %v467 = vunpack.c.l.b16 %v431
      %v468 = vunpack.c.l.b16 %v432
      %v469 = vunpack.c.l.b16 %v433
      %v470 = vunpack.c.l.b16 %v434
      %v471 = vunpack.c.l.b16 %v435
      %v472 = vunpack.c.l.b16 %v436
      %v473 = vpack.c.b16 %v458, %v457
      %v474 = vpack.c.b16 %v460, %v459
      %v475 = vpack.c.b16 %v462, %v461
      %v476 = vpack.c.b16 %v464, %v463
      %v477 = vpack.c.b16 %v466, %v465
      %v478 = vpack.c.b16 %v468, %v467
      %v479 = vpack.c.b16 %v470, %v469
      %v480 = vpack.c.b16 %v472, %v471
      %489 = vmatprep.subr.bf16.mxu0 0
      %490 = vmatpush1.bf16.msra.mxu0 %v473
      %491 = vmatprep.subr.bf16.mxu0 0
      %492 = vmatpush1.bf16.msra.mxu0 %v474
      %493 = vmatprep.subr.bf16.mxu0 0
      %494 = vmatpush1.bf16.msra.mxu0 %v475
      %495 = vmatprep.subr.bf16.mxu0 0
      %496 = vmatpush1.bf16.msra.mxu0 %v476
      %497 = vmatprep.subr.bf16.mxu0 0
      %498 = vmatpush1.bf16.msra.mxu0 %v477
      %499 = vmatprep.subr.bf16.mxu0 0
      %500 = vmatpush1.bf16.msra.mxu0 %v478
      %501 = vmatprep.subr.bf16.mxu0 0
      %502 = vmatpush1.bf16.msra.mxu0 %v479
      %503 = vmatprep.subr.bf16.mxu0 0
      %504 = vmatpush1.bf16.msra.mxu0 %v480
      %505 = vmatprep.subr.bf16.mxu0 0
      %506 = vmatpush1.bf16.msra.mxu0 0
      %507 = vmatprep.subr.bf16.mxu0 0
      %508 = vmatpush1.bf16.msra.mxu0 0
      %509 = vmatprep.subr.bf16.mxu0 0
      %510 = vmatpush1.bf16.msra.mxu0 0
      %511 = vmatprep.subr.bf16.mxu0 0
      %512 = vmatpush1.bf16.msra.mxu0 0
      %513 = vmatprep.subr.bf16.mxu0 0
      %514 = vmatpush1.bf16.msra.mxu0 0
      %515 = vmatprep.subr.bf16.mxu0 0
      %516 = vmatpush1.bf16.msra.mxu0 0
      %517 = vmatprep.subr.bf16.mxu0 0
      %518 = vmatpush1.bf16.msra.mxu0 0
      %519 = vmatprep.subr.bf16.mxu0 0
      %520 = vmatpush1.bf16.msra.mxu0 0
      %521 = vmatprep.mubr.bf16.mxu0 0
      %522 = vmatmul.mubr.bf16.gmra.mrb[0].mxu0 %v439
      %v523 = vpop.f32.mrb[0].mxu0
      %v524 = vadd.f32 0.0, %v523
      %v525 = vpop.f32.mrb[0].mxu0
      %v526 = vpop.f32.mrb[0].mxu0
      %v527 = vadd.f32 0.0, %v526
      %v528 = vpop.f32.mrb[0].mxu0
      %529 = vdwg.mxu0
      %v530 = vadd.f32 %v418, %v524
      %v531 = vadd.f32 %v419, %v527
      %532 = vst [vmem:[#allocation2] sm:$0xff] %v530
      %533 = vst [vmem:[#allocation2 + $0x8] sm:$0xff] %v531
      %v535 = vshrl.u32 %v264, 16
      %v537 = vrot.slane %v535, 4
      %v538 = vshll.u32 %v264, 16
      %v540 = vrot.slane %v538, 5
      %v541 = vor.u32 %v537, %v540
      %v542 = vrot.slane %v541, 4
      %v543 = vsel %vm389, %v542, %v396
      %v545 = vshrl.u32 %v267, 16
      %v547 = vrot.slane %v545, 4
      %v548 = vshll.u32 %v267, 16
      %v550 = vrot.slane %v548, 5
      %v551 = vor.u32 %v547, %v550
      %v552 = vrot.slane %v551, 4
      %v553 = vsel %vm389, %v552, %v410
      %v554 = vld [vmem:[#allocation2] sm:$0xff]
      %v555 = vld [vmem:[#allocation2 + $0x8] sm:$0xff]
      %s556 = scalar_lea.vmem %s245, 128
      %v557 = vld [vmem:[%s556] sm:$0xf]
      %v558 = vld [vmem:[%s556 + $0x4] sm:$0xf]
      %v559 = vld [vmem:[%s556 + $0x8] sm:$0xf]
      %v560 = vld [vmem:[%s556 + $0xc] sm:$0xf]
      %v561 = vld [vmem:[%s556 + $0x10] sm:$0xf]
      %v562 = vld [vmem:[%s556 + $0x14] sm:$0xf]
      %v563 = vld [vmem:[%s556 + $0x18] sm:$0xf]
      %v564 = vld [vmem:[%s556 + $0x1c] sm:$0xf]
      %v565 = vld [vmem:[%s556 + $0x20] sm:$0xf]
      %v566 = vld [vmem:[%s556 + $0x24] sm:$0xf]
      %v567 = vld [vmem:[%s556 + $0x28] sm:$0xf]
      %v568 = vld [vmem:[%s556 + $0x2c] sm:$0xf]
      %v569 = vld [vmem:[%s556 + $0x30] sm:$0xf]
      %v570 = vld [vmem:[%s556 + $0x34] sm:$0xf]
      %v571 = vld [vmem:[%s556 + $0x38] sm:$0xf]
      %v572 = vld [vmem:[%s556 + $0x3c] sm:$0xf]
      %v573 = vunpack.c.l.b16 %v543
      %v574 = vunpack.c.l.b16 %v553
      %v575 = vpack.c.b16 %v574, %v573
      %v593 = vunpack.c.l.b16 %v557
      %v594 = vunpack.c.l.b16 %v558
      %v595 = vunpack.c.l.b16 %v559
      %v596 = vunpack.c.l.b16 %v560
      %v597 = vunpack.c.l.b16 %v561
      %v598 = vunpack.c.l.b16 %v562
      %v599 = vunpack.c.l.b16 %v563
      %v600 = vunpack.c.l.b16 %v564
      %v601 = vunpack.c.l.b16 %v565
      %v602 = vunpack.c.l.b16 %v566
      %v603 = vunpack.c.l.b16 %v567
      %v604 = vunpack.c.l.b16 %v568
      %v605 = vunpack.c.l.b16 %v569
      %v606 = vunpack.c.l.b16 %v570
      %v607 = vunpack.c.l.b16 %v571
      %v608 = vunpack.c.l.b16 %v572
      %v609 = vpack.c.b16 %v594, %v593
      %v610 = vpack.c.b16 %v596, %v595
      %v611 = vpack.c.b16 %v598, %v597
      %v612 = vpack.c.b16 %v600, %v599
      %v613 = vpack.c.b16 %v602, %v601
      %v614 = vpack.c.b16 %v604, %v603
      %v615 = vpack.c.b16 %v606, %v605
      %v616 = vpack.c.b16 %v608, %v607
      %625 = vmatprep.subr.bf16.mxu0 0
      %626 = vmatpush1.bf16.msra.mxu0 %v609
      %627 = vmatprep.subr.bf16.mxu0 0
      %628 = vmatpush1.bf16.msra.mxu0 %v610
      %629 = vmatprep.subr.bf16.mxu0 0
      %630 = vmatpush1.bf16.msra.mxu0 %v611
      %631 = vmatprep.subr.bf16.mxu0 0
      %632 = vmatpush1.bf16.msra.mxu0 %v612
      %633 = vmatprep.subr.bf16.mxu0 0
      %634 = vmatpush1.bf16.msra.mxu0 %v613
      %635 = vmatprep.subr.bf16.mxu0 0
      %636 = vmatpush1.bf16.msra.mxu0 %v614
      %637 = vmatprep.subr.bf16.mxu0 0
      %638 = vmatpush1.bf16.msra.mxu0 %v615
      %639 = vmatprep.subr.bf16.mxu0 0
      %640 = vmatpush1.bf16.msra.mxu0 %v616
      %641 = vmatprep.subr.bf16.mxu0 0
      %642 = vmatpush1.bf16.msra.mxu0 0
      %643 = vmatprep.subr.bf16.mxu0 0
      %644 = vmatpush1.bf16.msra.mxu0 0
      %645 = vmatprep.subr.bf16.mxu0 0
      %646 = vmatpush1.bf16.msra.mxu0 0
      %647 = vmatprep.subr.bf16.mxu0 0
      %648 = vmatpush1.bf16.msra.mxu0 0
      %649 = vmatprep.subr.bf16.mxu0 0
      %650 = vmatpush1.bf16.msra.mxu0 0
      %651 = vmatprep.subr.bf16.mxu0 0
      %652 = vmatpush1.bf16.msra.mxu0 0
      %653 = vmatprep.subr.bf16.mxu0 0
      %654 = vmatpush1.bf16.msra.mxu0 0
      %655 = vmatprep.subr.bf16.mxu0 0
      %656 = vmatpush1.bf16.msra.mxu0 0
      %657 = vmatprep.mubr.bf16.mxu0 0
      %658 = vmatmul.mubr.bf16.gmra.mrb[0].mxu0 %v575
      %v659 = vpop.f32.mrb[0].mxu0
      %v660 = vadd.f32 0.0, %v659
      %v661 = vpop.f32.mrb[0].mxu0
      %v662 = vpop.f32.mrb[0].mxu0
      %v663 = vadd.f32 0.0, %v662
      %v664 = vpop.f32.mrb[0].mxu0
      %665 = vdwg.mxu0
      %v666 = vadd.f32 %v554, %v660
      %v667 = vadd.f32 %v555, %v663
      %668 = vst [vmem:[#allocation2] sm:$0xff] %v666
      %669 = vst [vmem:[#allocation2 + $0x8] sm:$0xff] %v667
      %p670 = scmp.eq.s32.totalorder %s21, 2
      // Predicated region
      $region37: #{bottleneck_forward.4} parent=31 // pred_check
        %p671 = pneg %p670
      $region38: #{bottleneck_forward.4} parent=31 // pred_check_branch
        %673 = sbr.rel (%p671) target = $region40
      $region39: #{bottleneck_forward.4} parent=31 // pred_region
        %v674 = vld [vmem:[#allocation2] sm:$0xff]
        %v675 = vld [vmem:[#allocation2 + $0x8] sm:$0xff]
        %v676 = vld [vmem:[%s248] sm:$0x1]
        %v678 = vlaneseq
        %v679 = vshrl.u32 %v678, 7
        %v680 = vsub.s32 0, %v679
        %v681 = vrot.slane %v676, %v680
        %v683 = vadd.f32 %v674, %v681
        %v684 = vadd.f32 %v675, %v681
        %v685 = vmax.f32 %v683, 0.0
        %v686 = vmax.f32 %v684, 0.0
        %v687 = vpack.c.bf16 %v685, %v685
        %v688 = vpack.c.bf16 %v686, %v686
        %689 = vst [vmem:[%s256] sm:$0xf] %v687
        %690 = vst [vmem:[%s256 + $0x4] sm:$0xf] %v688
      $region40: #{bottleneck_forward.4} parent=31 // pred_fallthru
        _
      %p691 = scmp.lt.s32.totalorder %s19, 7
      %s692 = scalar_select %p691, %s19, 7
      %p693 = scmp.lt.s32.totalorder %s20, 0
      %s694 = scalar_select %p693, %s20, 0
      %s695 = smul.addr %s692, 2
      %s696 = sadd.s32 %s694, %s695
      %s697 = smul.addr %s696, 4
      %s698 = scalar_lea.vmem %s3, %s697
      // Predicated region
      $region41: #{bottleneck_forward.4} parent=31 // pred_check
        %p699 = pneg %p137
      $region42: #{bottleneck_forward.4} parent=31 // pred_check_branch
        %701 = sbr.rel (%p699) target = $region44
      $region43: #{bottleneck_forward.4} parent=31 // pred_region
        _
      $region44: #{bottleneck_forward.4} parent=31 // pred_fallthru
        _
    $region32: #{bottleneck_forward.4} parent=5 // pred_fallthru
      _
    %p702 = scmp.le.s32.totalorder 2, %s9
    // Predicated region
    $region45: #{bottleneck_forward.4} parent=5 // pred_check
      %p703 = pneg %p702
    $region46: #{bottleneck_forward.4} parent=5 // pred_check_branch
      %705 = sbr.rel (%p703) target = $region48
    $region47: #{bottleneck_forward.4} parent=5 // pred_region
      %s706 = ssub.s32 %s9, 2
      // Predicated region
      $region49: #{bottleneck_forward.4} parent=47 // pred_check
        %p707 = pneg %p143
      $region50: #{bottleneck_forward.4} parent=47 // pred_check_branch
        %709 = sbr.rel (%p707) target = $region52
      $region51: #{bottleneck_forward.4} parent=47 // pred_region
        %p710 = scmp.lt.s32.totalorder %s22, 7
        %s711 = scalar_select %p710, %s22, 7
        %p712 = scmp.lt.s32.totalorder %s23, 0
        %s713 = scalar_select %p712, %s23, 0
        %s714 = smul.addr %s711, 2
        %s715 = sadd.s32 %s713, %s714
        %s716 = smul.addr %s715, 4
        %s717 = scalar_lea.vmem %s3, %s716
      $region52: #{bottleneck_forward.4} parent=47 // pred_fallthru
        _
    $region48: #{bottleneck_forward.4} parent=5 // pred_fallthru
      _
  $region6: #{bottleneck_forward.4} parent=0 // loop_footer
    %s13 = sadd.s32 1, %s9
  $region7: #{bottleneck_forward.4} parent=0 // loop_footer_branch
    %8 = sbr.rel target = $region3
  $region8: #{bottleneck_forward.4} parent=0 // loop_exit
    _

// kernel: bottleneck_forward.5
$region0: #{bottleneck_forward.5}
  #allocation0 [shape = 'u32[]', space=smem, size = 0x4, offset = 0x4, fixed_abs, tag = 'smem constant byte address 0x4 - core index']
  #allocation1 [shape = 'u32[144,128]{1,0:T(1,128)}', space=vmem, size = 0x12000, scoped, tag = 'internal scratch']
  %s0 = inlined_call_operand.vmem [shape: bf16[128,128], index: 0, kind: input, shape index: {}]
  %s1 = inlined_call_operand.vmem [shape: bf16[128,128], index: 1, kind: input, shape index: {}]
  %s2 = inlined_call_operand.vmem [shape: f32[128,4], index: 2, kind: input, shape index: {}]
  %s3 = inlined_call_operand.vmem [shape: bf16[4,128], index: 3, kind: input, shape index: {}]
  %s4 = inlined_call_operand.vmem [shape: f32[1,128], index: 4, kind: input, shape index: {}]
  %s5 = inlined_call_operand.vmem [shape: f32[128,128], index: 5, kind: output, shape index: {}]
  %s6 = sld [smem:[#allocation0]]
  $region53: #{bottleneck_forward.5} parent=0
    _
  %s8 = ssub.s32 1, %s6
  %s9 = scalar_select 0, %s8, %s6
  loop: start=0, step=1, limit=4
  $region2: #{bottleneck_forward.5} parent=0 // loop_pre_header
    _
  $region3: #{bottleneck_forward.5} parent=0 // loop_header
    %s11 = sphi 0, %s15
    %p12 = scmp.ge.s32.totalorder %s11, 4
    %s18 = sphi 0, %s30
    %s19 = sphi 0, %s26
    %s20 = sphi 0, %s18
    %s21 = sphi 0, %s19
    %s22 = sphi 0, %s20
    %s23 = sphi 0, %s21
    %s33 = sphi 0, %s35
    %s36 = sphi 0, %s33
    %s37 = sphi 0, %s36
    %s53 = sphi 0, %s37
    %s59 = sphi 0, %s61
    %s62 = sphi 0, %s59
    %s63 = sphi 0, %s62
    %s79 = sphi 0, %s63
    %s85 = sphi 0, %s87
    %s88 = sphi 0, %s85
    %s89 = sphi 0, %s88
    %s105 = sphi 0, %s89
    %s111 = sphi 0, %s113
    %s114 = sphi 0, %s111
    %s115 = sphi 0, %s114
    %s131 = sphi 0, %s115
    %s137 = sphi 0, %s139
    %s140 = sphi 0, %s137
    %s141 = sphi 0, %s140
    %s157 = sphi 0, %s141
    %s165 = sphi 0, %s167
    %s168 = sphi 0, %s165
    %s169 = sphi 0, %s168
    %s185 = sphi 0, %s169
  $region4: #{bottleneck_forward.5} parent=0 // loop_header_branch
    %14 = sbr.rel (%p12) target = $region8
  $region5: #{bottleneck_forward.5} parent=0 // loop_body
    %s16 = ssub.s32 %s11, 1
    %s17 = ssub.s32 %s11, 2
    %s24 = sadd.s32 1, %s19
    %p25 = scmp.ge.s32.totalorder %s24, 1
    %s26 = scalar_select %p25, 0, %s24
    %s27 = sadd.s32 1, %s18
    %s28 = scalar_select %p25, %s27, %s18
    %p29 = scmp.ge.s32.totalorder %s28, 2
    %s30 = scalar_select %p29, 0, %s28
    %s31 = ssub.s32 %s18, %s30
    %p32 = scmp.eq.s32.totalorder %s31, 0
    %s34 = sadd.s32 %s33, 1
    %s35 = scalar_select %p32, %s33, %s34
    %p38 = pneg %p32
    %p39 = scmp.eq.s32.totalorder %s11, 1
    %p40 = por %p38, %p39
    %p41 = scmp.ne.s32.totalorder %s33, %s36
    %p42 = scmp.eq.s32.totalorder %s11, 0
    %p43 = por %p41, %p42
    %p44 = scmp.ne.s32.totalorder %s33, %s36
    %p45 = scmp.eq.s32.totalorder %s16, 1
    %p46 = por %p44, %p45
    %p47 = scmp.ne.s32.totalorder %s36, %s37
    %p48 = scmp.eq.s32.totalorder %s16, 0
    %p49 = por %p47, %p48
    %p50 = scmp.ne.s32.totalorder %s36, %s37
    %p51 = scmp.eq.s32.totalorder %s17, 1
    %p52 = por %p50, %p51
    %p54 = scmp.ne.s32.totalorder %s37, %s53
    %p55 = scmp.eq.s32.totalorder %s17, 0
    %p56 = por %p54, %p55
    %s57 = ssub.s32 %s19, %s26
    %p58 = scmp.eq.s32.totalorder %s57, 0
    %s60 = sadd.s32 %s59, 1
    %s61 = scalar_select %p58, %s59, %s60
    %p64 = pneg %p58
    %p65 = scmp.eq.s32.totalorder %s11, 1
    %p66 = por %p64, %p65
    %p67 = scmp.ne.s32.totalorder %s59, %s62
    %p68 = scmp.eq.s32.totalorder %s11, 0
    %p69 = por %p67, %p68
    %p70 = scmp.ne.s32.totalorder %s59, %s62
    %p71 = scmp.eq.s32.totalorder %s16, 1
    %p72 = por %p70, %p71
    %p73 = scmp.ne.s32.totalorder %s62, %s63
    %p74 = scmp.eq.s32.totalorder %s16, 0
    %p75 = por %p73, %p74
    %p76 = scmp.ne.s32.totalorder %s62, %s63
    %p77 = scmp.eq.s32.totalorder %s17, 1
    %p78 = por %p76, %p77
    %p80 = scmp.ne.s32.totalorder %s63, %s79
    %p81 = scmp.eq.s32.totalorder %s17, 0
    %p82 = por %p80, %p81
    %s83 = ssub.s32 %s18, %s30
    %p84 = scmp.eq.s32.totalorder %s83, 0
    %s86 = sadd.s32 %s85, 1
    %s87 = scalar_select %p84, %s85, %s86
    %p90 = pneg %p84
    %p91 = scmp.eq.s32.totalorder %s11, 1
    %p92 = por %p90, %p91
    %p93 = scmp.ne.s32.totalorder %s85, %s88
    %p94 = scmp.eq.s32.totalorder %s11, 0
    %p95 = por %p93, %p94
    %p96 = scmp.ne.s32.totalorder %s85, %s88
    %p97 = scmp.eq.s32.totalorder %s16, 1
    %p98 = por %p96, %p97
    %p99 = scmp.ne.s32.totalorder %s88, %s89
    %p100 = scmp.eq.s32.totalorder %s16, 0
    %p101 = por %p99, %p100
    %p102 = scmp.ne.s32.totalorder %s88, %s89
    %p103 = scmp.eq.s32.totalorder %s17, 1
    %p104 = por %p102, %p103
    %p106 = scmp.ne.s32.totalorder %s89, %s105
    %p107 = scmp.eq.s32.totalorder %s17, 0
    %p108 = por %p106, %p107
    %s109 = ssub.s32 %s19, %s26
    %p110 = scmp.eq.s32.totalorder %s109, 0
    %s112 = sadd.s32 %s111, 1
    %s113 = scalar_select %p110, %s111, %s112
    %p116 = pneg %p110
    %p117 = scmp.eq.s32.totalorder %s11, 1
    %p118 = por %p116, %p117
    %p119 = scmp.ne.s32.totalorder %s111, %s114
    %p120 = scmp.eq.s32.totalorder %s11, 0
    %p121 = por %p119, %p120
    %p122 = scmp.ne.s32.totalorder %s111, %s114
    %p123 = scmp.eq.s32.totalorder %s16, 1
    %p124 = por %p122, %p123
    %p125 = scmp.ne.s32.totalorder %s114, %s115
    %p126 = scmp.eq.s32.totalorder %s16, 0
    %p127 = por %p125, %p126
    %p128 = scmp.ne.s32.totalorder %s114, %s115
    %p129 = scmp.eq.s32.totalorder %s17, 1
    %p130 = por %p128, %p129
    %p132 = scmp.ne.s32.totalorder %s115, %s131
    %p133 = scmp.eq.s32.totalorder %s17, 0
    %p134 = por %p132, %p133
    %s135 = ssub.s32 %s19, %s26
    %p136 = scmp.eq.s32.totalorder %s135, 0
    %s138 = sadd.s32 %s137, 1
    %s139 = scalar_select %p136, %s137, %s138
    %p142 = pneg %p136
    %p143 = scmp.eq.s32.totalorder %s11, 1
    %p144 = por %p142, %p143
    %p145 = scmp.ne.s32.totalorder %s137, %s140
    %p146 = scmp.eq.s32.totalorder %s11, 0
    %p147 = por %p145, %p146
    %p148 = scmp.ne.s32.totalorder %s137, %s140
    %p149 = scmp.eq.s32.totalorder %s16, 1
    %p150 = por %p148, %p149
    %p151 = scmp.ne.s32.totalorder %s140, %s141
    %p152 = scmp.eq.s32.totalorder %s16, 0
    %p153 = por %p151, %p152
    %p154 = scmp.ne.s32.totalorder %s140, %s141
    %p155 = scmp.eq.s32.totalorder %s17, 1
    %p156 = por %p154, %p155
    %p158 = scmp.ne.s32.totalorder %s141, %s157
    %p159 = scmp.eq.s32.totalorder %s17, 0
    %p160 = por %p158, %p159
    %s161 = ssub.s32 %s18, %s30
    %s162 = ssub.s32 %s19, %s26
    %s163 = sor.u32 %s161, %s162
    %p164 = scmp.eq.s32.totalorder %s163, 0
    %s166 = sadd.s32 %s165, 1
    %s167 = scalar_select %p164, %s165, %s166
    %p170 = pneg %p164
    %p171 = scmp.eq.s32.totalorder %s11, 1
    %p172 = por %p170, %p171
    %p173 = scmp.ne.s32.totalorder %s165, %s168
    %p174 = scmp.eq.s32.totalorder %s11, 0
    %p175 = por %p173, %p174
    %p176 = scmp.ne.s32.totalorder %s165, %s168
    %p177 = scmp.eq.s32.totalorder %s16, 1
    %p178 = por %p176, %p177
    %p179 = scmp.ne.s32.totalorder %s168, %s169
    %p180 = scmp.eq.s32.totalorder %s16, 0
    %p181 = por %p179, %p180
    %p182 = scmp.ne.s32.totalorder %s168, %s169
    %p183 = scmp.eq.s32.totalorder %s17, 1
    %p184 = por %p182, %p183
    %p186 = scmp.ne.s32.totalorder %s169, %s185
    %p187 = scmp.eq.s32.totalorder %s17, 0
    %p188 = por %p186, %p187
    %p189 = scmp.le.s32.totalorder 1, %s11
    %p190 = scmp.lt.s32.totalorder %s11, 3
    %p191 = pnand %p189, %p190
    %p192 = pneg %p191
    // Predicated region
    $region9: #{bottleneck_forward.5} parent=5 // pred_check
      _
    $region10: #{bottleneck_forward.5} parent=5 // pred_check_branch
      %194 = sbr.rel (%p191) target = $region12
    $region11: #{bottleneck_forward.5} parent=5 // pred_region
      %s195 = ssub.s32 %s11, 1
      // Predicated region
      $region13: #{bottleneck_forward.5} parent=11 // pred_check
        %p196 = pneg %p75
      $region14: #{bottleneck_forward.5} parent=11 // pred_check_branch
        %198 = sbr.rel (%p196) target = $region16
      $region15: #{bottleneck_forward.5} parent=11 // pred_region
        %p199 = scmp.lt.s32.totalorder %s21, 0
        %s200 = scalar_select %p199, %s21, 0
        %s201 = smul.addr %s200, 4
        %s202 = scalar_lea.vmem %s1, %s201
      $region16: #{bottleneck_forward.5} parent=11 // pred_fallthru
        _
      // Predicated region
      $region17: #{bottleneck_forward.5} parent=11 // pred_check
        %p203 = pneg %p127
      $region18: #{bottleneck_forward.5} parent=11 // pred_check_branch
        %205 = sbr.rel (%p203) target = $region20
      $region19: #{bottleneck_forward.5} parent=11 // pred_region
        %p206 = scmp.lt.s32.totalorder %s21, 0
        %s207 = scalar_select %p206, %s21, 0
        %s208 = smul.addr %s207, 2
        %s209 = scalar_lea.vmem %s3, %s208
      $region20: #{bottleneck_forward.5} parent=11 // pred_fallthru
        _
      // Predicated region
      $region21: #{bottleneck_forward.5} parent=11 // pred_check
        %p210 = pneg %p153
      $region22: #{bottleneck_forward.5} parent=11 // pred_check_branch
        %212 = sbr.rel (%p210) target = $region24
      $region23: #{bottleneck_forward.5} parent=11 // pred_region
        %p213 = scmp.lt.s32.totalorder %s21, 0
        %s214 = scalar_select %p213, %s21, 0
        %s215 = scalar_lea.vmem %s4, %s214
      $region24: #{bottleneck_forward.5} parent=11 // pred_fallthru
        _
    $region12: #{bottleneck_forward.5} parent=5 // pred_fallthru
      _
    %p216 = scmp.lt.s32.totalorder %s11, 2
    // Predicated region
    $region25: #{bottleneck_forward.5} parent=5 // pred_check
      %p217 = pneg %p216
    $region26: #{bottleneck_forward.5} parent=5 // pred_check_branch
      %219 = sbr.rel (%p217) target = $region28
    $region27: #{bottleneck_forward.5} parent=5 // pred_region
      // Predicated region
      $region29: #{bottleneck_forward.5} parent=27 // pred_check
        %p220 = pneg %p43
      $region30: #{bottleneck_forward.5} parent=27 // pred_check_branch
        %222 = sbr.rel (%p220) target = $region32
      $region31: #{bottleneck_forward.5} parent=27 // pred_region
        %s223 = smul.u32 8, %s18
        %p224 = scmp.lt.s32.totalorder %s223, 15
        %s225 = scalar_select %p224, %s223, 15
        %s226 = smul.addr %s225, 4
        %s227 = scalar_lea.vmem %s0, %s226
        %s228 = smul.u32 8, %s18
      $region32: #{bottleneck_forward.5} parent=27 // pred_fallthru
        _
      // Predicated region
      $region33: #{bottleneck_forward.5} parent=27 // pred_check
        %p229 = pneg %p95
      $region34: #{bottleneck_forward.5} parent=27 // pred_check_branch
        %231 = sbr.rel (%p229) target = $region36
      $region35: #{bottleneck_forward.5} parent=27 // pred_region
        %s232 = smul.u32 8, %s18
        %p233 = scmp.lt.s32.totalorder %s232, 15
        %s234 = scalar_select %p233, %s232, 15
        %s235 = smul.addr %s234, 8
        %s236 = scalar_lea.vmem %s2, %s235
        %s237 = smul.u32 8, %s18
      $region36: #{bottleneck_forward.5} parent=27 // pred_fallthru
        _
    $region28: #{bottleneck_forward.5} parent=5 // pred_fallthru
      _
    %p238 = scmp.le.s32.totalorder 1, %s11
    %p239 = scmp.lt.s32.totalorder %s11, 3
    %p240 = pnand %p238, %p239
    %p241 = pneg %p240
    // Predicated region
    $region37: #{bottleneck_forward.5} parent=5 // pred_check
      _
    $region38: #{bottleneck_forward.5} parent=5 // pred_check_branch
      %243 = sbr.rel (%p240) target = $region40
    $region39: #{bottleneck_forward.5} parent=5 // pred_region
      %s244 = ssub.s32 %s11, 1
      %s245 = smul.u32 8, %s20
      %p246 = scmp.lt.s32.totalorder %s245, 15
      %s247 = scalar_select %p246, %s245, 15
      %s248 = smul.addr %s247, 4
      %s249 = scalar_lea.vmem %s0, %s248
      %p250 = pneg %p49
      %p251 = pneg %p46
      %p252 = scmp.lt.s32.totalorder %s21, 0
      %s253 = scalar_select %p252, %s21, 0
      %s254 = smul.addr %s253, 4
      %s255 = scalar_lea.vmem %s1, %s254
      %p256 = pneg %p75
      %p257 = pneg %p72
      %s258 = smul.u32 8, %s20
      %p259 = scmp.lt.s32.totalorder %s258, 15
      %s260 = scalar_select %p259, %s258, 15
      %s261 = smul.addr %s260, 8
      %s262 = scalar_lea.vmem %s2, %s261
      %p263 = pneg %p101
      %p264 = pneg %p98
      %p265 = scmp.lt.s32.totalorder %s21, 0
      %s266 = scalar_select %p265, %s21, 0
      %s267 = smul.addr %s266, 2
      %s268 = scalar_lea.vmem %s3, %s267
      %p269 = pneg %p127
      %p270 = pneg %p124
      %p271 = scmp.lt.s32.totalorder %s21, 0
      %s272 = scalar_select %p271, %s21, 0
      %s273 = scalar_lea.vmem %s4, %s272
      %p274 = pneg %p153
      %p275 = pneg %p150
      %p276 = pneg %p181
      %p277 = pneg %p178
      %s278 = smul.u32 8, %s20
      %p279 = scmp.lt.s32.totalorder %s278, 15
      %s280 = scalar_select %p279, %s278, 15
      %p281 = scmp.lt.s32.totalorder %s21, 0
      %s282 = scalar_select %p281, %s21, 0
      %s283 = sadd.s32 %s282, %s280
      %s284 = smul.addr %s283, 8
      %s285 = scalar_lea.vmem %s5, %s284
      %s286 = smul.u32 8, %s20
      %p287 = scmp.lt.s32.totalorder %s286, 15
      %s288 = scalar_select %p287, %s286, 15
      %s289 = smul.addr %s288, 4
      %s290 = scalar_lea.vmem %s0, %s289
      %s291 = smul.u32 8, %s20
      %p292 = scmp.lt.s32.totalorder %s21, 0
      %s293 = scalar_select %p292, %s21, 0
      %s294 = smul.addr %s293, 4
      %s295 = scalar_lea.vmem %s1, %s294
      %s296 = smul.u32 8, %s20
      %p297 = scmp.lt.s32.totalorder %s296, 15
      %s298 = scalar_select %p297, %s296, 15
      %s299 = smul.addr %s298, 8
      %s300 = scalar_lea.vmem %s2, %s299
      %s301 = smul.u32 8, %s20
      %p302 = scmp.lt.s32.totalorder %s21, 0
      %s303 = scalar_select %p302, %s21, 0
      %s304 = smul.addr %s303, 2
      %s305 = scalar_lea.vmem %s3, %s304
      %p306 = scmp.lt.s32.totalorder %s21, 0
      %s307 = scalar_select %p306, %s21, 0
      %s308 = scalar_lea.vmem %s4, %s307
      %s309 = smul.u32 8, %s20
      %p310 = scmp.lt.s32.totalorder %s309, 15
      %s311 = scalar_select %p310, %s309, 15
      %p312 = scmp.lt.s32.totalorder %s21, 0
      %s313 = scalar_select %p312, %s21, 0
      %s314 = sadd.s32 %s313, %s311
      %s315 = smul.addr %s314, 8
      %s316 = scalar_lea.vmem %s5, %s315
      %s317 = smul.u32 8, %s20
      %v319 = vld [vmem:[%s290] sm:$0xf]
      %v320 = vld [vmem:[%s290 + $0x4] sm:$0xf]
      %v321 = vld [vmem:[%s290 + $0x8] sm:$0xf]
      %v322 = vld [vmem:[%s290 + $0xc] sm:$0xf]
      %v323 = vld [vmem:[%s290 + $0x10] sm:$0xf]
      %v324 = vld [vmem:[%s290 + $0x14] sm:$0xf]
      %v325 = vld [vmem:[%s290 + $0x18] sm:$0xf]
      %v326 = vld [vmem:[%s290 + $0x1c] sm:$0xf]
      %v327 = vld [vmem:[%s295] sm:$0xf]
      %v328 = vld [vmem:[%s295 + $0x4] sm:$0xf]
      %v329 = vld [vmem:[%s295 + $0x8] sm:$0xf]
      %v330 = vld [vmem:[%s295 + $0xc] sm:$0xf]
      %v331 = vld [vmem:[%s295 + $0x10] sm:$0xf]
      %v332 = vld [vmem:[%s295 + $0x14] sm:$0xf]
      %v333 = vld [vmem:[%s295 + $0x18] sm:$0xf]
      %v334 = vld [vmem:[%s295 + $0x1c] sm:$0xf]
      %v335 = vld [vmem:[%s295 + $0x20] sm:$0xf]
      %v336 = vld [vmem:[%s295 + $0x24] sm:$0xf]
      %v337 = vld [vmem:[%s295 + $0x28] sm:$0xf]
      %v338 = vld [vmem:[%s295 + $0x2c] sm:$0xf]
      %v339 = vld [vmem:[%s295 + $0x30] sm:$0xf]
      %v340 = vld [vmem:[%s295 + $0x34] sm:$0xf]
      %v341 = vld [vmem:[%s295 + $0x38] sm:$0xf]
      %v342 = vld [vmem:[%s295 + $0x3c] sm:$0xf]
      %v343 = vld [vmem:[%s300] sm:$0xff]
      %v344 = vld [vmem:[%s300 + $0x8] sm:$0xff]
      %v345 = vld [vmem:[%s300 + $0x10] sm:$0xff]
      %v346 = vld [vmem:[%s300 + $0x18] sm:$0xff]
      %v347 = vld [vmem:[%s300 + $0x20] sm:$0xff]
      %v348 = vld [vmem:[%s300 + $0x28] sm:$0xff]
      %v349 = vld [vmem:[%s300 + $0x30] sm:$0xff]
      %v350 = vld [vmem:[%s300 + $0x38] sm:$0xff]
      %v351 = vpack.c.bf16 %v344, %v343
      %v352 = vpack.c.bf16 %v346, %v345
      %v353 = vpack.c.bf16 %v348, %v347
      %v354 = vpack.c.bf16 %v350, %v349
      %v355 = vld [vmem:[%s305] sm:$0x3]
      %vm356 = vcmask 31744
      %v358 = vsel %vm356, %v351, 0
      %v361 = vsel %vm356, %v352, 0
      %v364 = vsel %vm356, %v353, 0
      %v367 = vsel %vm356, %v354, 0
      %vm369 = vcmask 1041408
      %v371 = vsel %vm369, %v355, 0
      %373 = vmatprep.subr.bf16.mxu0 0
      %374 = vmatpush1.bf16.msra.mxu0 %v371
      %375 = vmatprep.subr.bf16.mxu0 0
      %376 = vmatpush1.bf16.msra.mxu0 0
      %377 = vmatprep.subr.bf16.mxu0 0
      %378 = vmatpush1.bf16.msra.mxu0 0
      %379 = vmatprep.subr.bf16.mxu0 0
      %380 = vmatpush1.bf16.msra.mxu0 0
      %381 = vmatprep.subr.bf16.mxu0 0
      %382 = vmatpush1.bf16.msra.mxu0 0
      %383 = vmatprep.subr.bf16.mxu0 0
      %384 = vmatpush1.bf16.msra.mxu0 0
      %385 = vmatprep.subr.bf16.mxu0 0
      %386 = vmatpush1.bf16.msra.mxu0 0
      %387 = vmatprep.subr.bf16.mxu0 0
      %388 = vmatpush1.bf16.msra.mxu0 0
      %389 = vmatprep.subr.bf16.mxu0 0
      %390 = vmatpush1.bf16.msra.mxu0 0
      %391 = vmatprep.subr.bf16.mxu0 0
      %392 = vmatpush1.bf16.msra.mxu0 0
      %393 = vmatprep.subr.bf16.mxu0 0
      %394 = vmatpush1.bf16.msra.mxu0 0
      %395 = vmatprep.subr.bf16.mxu0 0
      %396 = vmatpush1.bf16.msra.mxu0 0
      %397 = vmatprep.subr.bf16.mxu0 0
      %398 = vmatpush1.bf16.msra.mxu0 0
      %399 = vmatprep.subr.bf16.mxu0 0
      %400 = vmatpush1.bf16.msra.mxu0 0
      %401 = vmatprep.subr.bf16.mxu0 0
      %402 = vmatpush1.bf16.msra.mxu0 0
      %403 = vmatprep.subr.bf16.mxu0 0
      %404 = vmatpush1.bf16.msra.mxu0 0
      %405 = vmatprep.mubr.bf16.mxu0 0
      %406 = vmatmul.mubr.bf16.gmra.mrb[0].mxu0 %v358
      %v407 = vpop.f32.mrb[0].mxu0
      %v408 = vadd.f32 0.0, %v407
      %v409 = vpop.f32.mrb[0].mxu0
      %v410 = vpop.f32.mrb[0].mxu0
      %v411 = vadd.f32 0.0, %v410
      %v412 = vpop.f32.mrb[0].mxu0
      %413 = vmatprep.mubr.bf16.mxu0 0
      %414 = vmatmul.mubr.bf16.gmra.mrb[0].mxu0 %v361
      %v415 = vpop.f32.mrb[0].mxu0
      %v416 = vadd.f32 0.0, %v415
      %v417 = vpop.f32.mrb[0].mxu0
      %v418 = vpop.f32.mrb[0].mxu0
      %v419 = vadd.f32 0.0, %v418
      %v420 = vpop.f32.mrb[0].mxu0
      %421 = vmatprep.mubr.bf16.mxu0 0
      %422 = vmatmul.mubr.bf16.gmra.mrb[0].mxu0 %v364
      %v423 = vpop.f32.mrb[0].mxu0
      %v424 = vadd.f32 0.0, %v423
      %v425 = vpop.f32.mrb[0].mxu0
      %v426 = vpop.f32.mrb[0].mxu0
      %v427 = vadd.f32 0.0, %v426
      %v428 = vpop.f32.mrb[0].mxu0
      %429 = vmatprep.mubr.bf16.mxu0 0
      %430 = vmatmul.mubr.bf16.gmra.mrb[0].mxu0 %v367
      %v431 = vpop.f32.mrb[0].mxu0
      %v432 = vadd.f32 0.0, %v431
      %v433 = vpop.f32.mrb[0].mxu0
      %v434 = vpop.f32.mrb[0].mxu0
      %v435 = vadd.f32 0.0, %v434
      %v436 = vpop.f32.mrb[0].mxu0
      %437 = vdwg.mxu0
      %v446 = vunpack.c.l.b16 %v319
      %v447 = vunpack.c.l.b16 %v320
      %v448 = vunpack.c.l.b16 %v321
      %v449 = vunpack.c.l.b16 %v322
      %v450 = vunpack.c.l.b16 %v323
      %v451 = vunpack.c.l.b16 %v324
      %v452 = vunpack.c.l.b16 %v325
      %v453 = vunpack.c.l.b16 %v326
      %v454 = vpack.c.b16 %v447, %v446
      %v455 = vpack.c.b16 %v449, %v448
      %v456 = vpack.c.b16 %v451, %v450
      %v457 = vpack.c.b16 %v453, %v452
      %v478 = vunpack.c.l.b16 %v327
      %v479 = vunpack.c.l.b16 %v328
      %v480 = vunpack.c.l.b16 %v329
      %v481 = vunpack.c.l.b16 %v330
      %v482 = vunpack.c.l.b16 %v331
      %v483 = vunpack.c.l.b16 %v332
      %v484 = vunpack.c.l.b16 %v333
      %v485 = vunpack.c.l.b16 %v334
      %v486 = vunpack.c.l.b16 %v335
      %v487 = vunpack.c.l.b16 %v336
      %v488 = vunpack.c.l.b16 %v337
      %v489 = vunpack.c.l.b16 %v338
      %v490 = vunpack.c.l.b16 %v339
      %v491 = vunpack.c.l.b16 %v340
      %v492 = vunpack.c.l.b16 %v341
      %v493 = vunpack.c.l.b16 %v342
      %v494 = vpack.c.b16 %v479, %v478
      %v495 = vpack.c.b16 %v481, %v480
      %v496 = vpack.c.b16 %v483, %v482
      %v497 = vpack.c.b16 %v485, %v484
      %v498 = vpack.c.b16 %v487, %v486
      %v499 = vpack.c.b16 %v489, %v488
      %v500 = vpack.c.b16 %v491, %v490
      %v501 = vpack.c.b16 %v493, %v492
      %510 = vmatprep.subr.bf16.mxu0 0
      %511 = vmatpush1.bf16.msra.mxu0 %v494
      %512 = vmatprep.subr.bf16.mxu0 0
      %513 = vmatpush1.bf16.msra.mxu0 %v495
      %514 = vmatprep.subr.bf16.mxu0 0
      %515 = vmatpush1.bf16.msra.mxu0 %v496
      %516 = vmatprep.subr.bf16.mxu0 0
      %517 = vmatpush1.bf16.msra.mxu0 %v497
      %518 = vmatprep.subr.bf16.mxu0 0
      %519 = vmatpush1.bf16.msra.mxu0 %v498
      %520 = vmatprep.subr.bf16.mxu0 0
      %521 = vmatpush1.bf16.msra.mxu0 %v499
      %522 = vmatprep.subr.bf16.mxu0 0
      %523 = vmatpush1.bf16.msra.mxu0 %v500
      %524 = vmatprep.subr.bf16.mxu0 0
      %525 = vmatpush1.bf16.msra.mxu0 %v501
      %526 = vmatprep.subr.bf16.mxu0 0
      %527 = vmatpush1.bf16.msra.mxu0 0
      %528 = vmatprep.subr.bf16.mxu0 0
      %529 = vmatpush1.bf16.msra.mxu0 0
      %530 = vmatprep.subr.bf16.mxu0 0
      %531 = vmatpush1.bf16.msra.mxu0 0
      %532 = vmatprep.subr.bf16.mxu0 0
      %533 = vmatpush1.bf16.msra.mxu0 0
      %534 = vmatprep.subr.bf16.mxu0 0
      %535 = vmatpush1.bf16.msra.mxu0 0
      %536 = vmatprep.subr.bf16.mxu0 0
      %537 = vmatpush1.bf16.msra.mxu0 0
      %538 = vmatprep.subr.bf16.mxu0 0
      %539 = vmatpush1.bf16.msra.mxu0 0
      %540 = vmatprep.subr.bf16.mxu0 0
      %541 = vmatpush1.bf16.msra.mxu0 0
      %542 = vmatprep.mubr.bf16.mxu0 0
      %543 = vmatmul.mubr.bf16.gmra.mrb[0].mxu0 %v454
      %v544 = vpop.f32.mrb[0].mxu0
      %v545 = vadd.f32 %v408, %v544
      %v546 = vpop.f32.mrb[0].mxu0
      %v547 = vpop.f32.mrb[0].mxu0
      %v548 = vadd.f32 %v411, %v547
      %v549 = vpop.f32.mrb[0].mxu0
      %550 = vmatprep.mubr.bf16.mxu0 0
      %551 = vmatmul.mubr.bf16.gmra.mrb[0].mxu0 %v455
      %v552 = vpop.f32.mrb[0].mxu0
      %v553 = vadd.f32 %v416, %v552
      %v554 = vpop.f32.mrb[0].mxu0
      %v555 = vpop.f32.mrb[0].mxu0
      %v556 = vadd.f32 %v419, %v555
      %v557 = vpop.f32.mrb[0].mxu0
      %558 = vmatprep.mubr.bf16.mxu0 0
      %559 = vmatmul.mubr.bf16.gmra.mrb[0].mxu0 %v456
      %v560 = vpop.f32.mrb[0].mxu0
      %v561 = vadd.f32 %v424, %v560
      %v562 = vpop.f32.mrb[0].mxu0
      %v563 = vpop.f32.mrb[0].mxu0
      %v564 = vadd.f32 %v427, %v563
      %v565 = vpop.f32.mrb[0].mxu0
      %566 = vmatprep.mubr.bf16.mxu0 0
      %567 = vmatmul.mubr.bf16.gmra.mrb[0].mxu0 %v457
      %v568 = vpop.f32.mrb[0].mxu0
      %v569 = vadd.f32 %v432, %v568
      %v570 = vpop.f32.mrb[0].mxu0
      %v571 = vpop.f32.mrb[0].mxu0
      %v572 = vadd.f32 %v435, %v571
      %v573 = vpop.f32.mrb[0].mxu0
      %574 = vdwg.mxu0
      %v575 = vld [vmem:[%s308] sm:$0x1]
      %v577 = vlaneseq
      %v578 = vshrl.u32 %v577, 7
      %v579 = vsub.s32 0, %v578
      %v580 = vrot.slane %v575, %v579
      %v582 = vadd.f32 %v545, %v580
      %v583 = vadd.f32 %v548, %v580
      %v584 = vadd.f32 %v553, %v580
      %v585 = vadd.f32 %v556, %v580
      %v586 = vadd.f32 %v561, %v580
      %v587 = vadd.f32 %v564, %v580
      %v588 = vadd.f32 %v569, %v580
      %v589 = vadd.f32 %v572, %v580
      %v590 = vmax.f32 %v582, 0.0
      %v591 = vmax.f32 %v583, 0.0
      %v592 = vmax.f32 %v584, 0.0
      %v593 = vmax.f32 %v585, 0.0
      %v594 = vmax.f32 %v586, 0.0
      %v595 = vmax.f32 %v587, 0.0
      %v596 = vmax.f32 %v588, 0.0
      %v597 = vmax.f32 %v589, 0.0
      %598 = vst [vmem:[%s316] sm:$0xff] %v590
      %599 = vst [vmem:[%s316 + $0x8] sm:$0xff] %v591
      %600 = vst [vmem:[%s316 + $0x10] sm:$0xff] %v592
      %601 = vst [vmem:[%s316 + $0x18] sm:$0xff] %v593
      %602 = vst [vmem:[%s316 + $0x20] sm:$0xff] %v594
      %603 = vst [vmem:[%s316 + $0x28] sm:$0xff] %v595
      %604 = vst [vmem:[%s316 + $0x30] sm:$0xff] %v596
      %605 = vst [vmem:[%s316 + $0x38] sm:$0xff] %v597
      %s606 = smul.u32 8, %s20
      %p607 = scmp.lt.s32.totalorder %s606, 15
      %s608 = scalar_select %p607, %s606, 15
      %p609 = scmp.lt.s32.totalorder %s21, 0
      %s610 = scalar_select %p609, %s21, 0
      %s611 = sadd.s32 %s610, %s608
      %s612 = smul.addr %s611, 8
      %s613 = scalar_lea.vmem %s5, %s612
      // Predicated region
      $region41: #{bottleneck_forward.5} parent=39 // pred_check
        %p614 = pneg %p178
      $region42: #{bottleneck_forward.5} parent=39 // pred_check_branch
        %616 = sbr.rel (%p614) target = $region44
      $region43: #{bottleneck_forward.5} parent=39 // pred_region
        %s617 = smul.u32 8, %s20
      $region44: #{bottleneck_forward.5} parent=39 // pred_fallthru
        _
    $region40: #{bottleneck_forward.5} parent=5 // pred_fallthru
      _
    %p618 = scmp.le.s32.totalorder 2, %s11
    // Predicated region
    $region45: #{bottleneck_forward.5} parent=5 // pred_check
      %p619 = pneg %p618
    $region46: #{bottleneck_forward.5} parent=5 // pred_check_branch
      %621 = sbr.rel (%p619) target = $region48
    $region47: #{bottleneck_forward.5} parent=5 // pred_region
      %s622 = ssub.s32 %s11, 2
      // Predicated region
      $region49: #{bottleneck_forward.5} parent=47 // pred_check
        %p623 = pneg %p184
      $region50: #{bottleneck_forward.5} parent=47 // pred_check_branch
        %625 = sbr.rel (%p623) target = $region52
      $region51: #{bottleneck_forward.5} parent=47 // pred_region
        %s626 = smul.u32 8, %s22
        %p627 = scmp.lt.s32.totalorder %s626, 15
        %s628 = scalar_select %p627, %s626, 15
        %p629 = scmp.lt.s32.totalorder %s23, 0
        %s630 = scalar_select %p629, %s23, 0
        %s631 = sadd.s32 %s630, %s628
        %s632 = smul.addr %s631, 8
        %s633 = scalar_lea.vmem %s5, %s632
      $region52: #{bottleneck_forward.5} parent=47 // pred_fallthru
        _
    $region48: #{bottleneck_forward.5} parent=5 // pred_fallthru
      _
  $region6: #{bottleneck_forward.5} parent=0 // loop_footer
    %s15 = sadd.s32 1, %s11
  $region7: #{bottleneck_forward.5} parent=0 // loop_footer_branch
    %10 = sbr.rel target = $region3
  $region8: #{bottleneck_forward.5} parent=0 // loop_exit
    _

</llo_original>
